<compile_context>
chip_gen: v5e
topology: v5e:2x2
jax: 0.10.0
libtpu: 0.0.40
codegen_flags: <defaults>
</compile_context>

<pallas_src>
import functools

import jax
import jax.numpy as jnp
import numpy as np
from jax.experimental import pallas as pl
from jax.experimental.pallas import tpu as pltpu


def _mha_kernel(q_ref, k_ref, v_ref,
                wq_ref, bq_ref, wk_ref, bk_ref, wv_ref, bv_ref, wo_ref, bo_ref,
                o_ref, *rest,
                num_heads, head_dim, batch_block, seq_len, return_attention):
    if return_attention:
        attn_ref, ctx_ref = rest
    else:
        (ctx_ref,) = rest

    Bb, S, hd = batch_block, seq_len, head_dim
    H = num_heads * head_dim

    x_q = q_ref[...]            # (Bb*S, H)
    x_k = k_ref[...]
    x_v = v_ref[...]

    # Full-H, lane-dense projections. The 1/sqrt(hd) scale is already folded into
    # wq/bq by the wrapper, so `energy` below needs no extra multiply.
    Q = (jnp.dot(x_q, wq_ref[...], preferred_element_type=jnp.float32)
         + bq_ref[...]).reshape(Bb, S, H)
    K = (jnp.dot(x_k, wk_ref[...], preferred_element_type=jnp.float32)
         + bk_ref[...]).reshape(Bb, S, H)
    V = (jnp.dot(x_v, wv_ref[...], preferred_element_type=jnp.float32)
         + bv_ref[...]).reshape(Bb, S, H)

    # Per-head attention. Each iteration writes its context into the scratch slab
    # and (optionally) its probabilities straight to the output ref, so nothing but
    # Q/K/V (needed by every head anyway) stays live across iterations.
    for h in range(num_heads):
        lo = h * hd
        Qh = Q[:, :, lo:lo + hd]          # (Bb, S, hd) — static lane slice
        Kh = K[:, :, lo:lo + hd]
        Vh = V[:, :, lo:lo + hd]

        # QK^T as a batched dot_general contracting head_dim (no explicit transpose).
        energy = jnp.einsum("bqd,bkd->bqk", Qh, Kh,
                            preferred_element_type=jnp.float32)   # (Bb, S, S)

        # Numerically stable softmax; one reciprocal per row instead of a divide.
        m = jnp.max(energy, axis=-1, keepdims=True)
        p = jnp.exp(energy - m)
        attn_h = p * pl.reciprocal(jnp.sum(p, axis=-1, keepdims=True))

        if return_attention:
            attn_ref[:, h, :, :] = attn_h.astype(attn_ref.dtype)

        ctx_h = jnp.einsum("bqk,bkd->bqd", attn_h, Vh,
                           preferred_element_type=jnp.float32)    # (Bb, S, hd)
        ctx_ref[:, lo:lo + hd] = ctx_h.reshape(Bb * S, hd)

    # Single full-depth output projection (concat of heads is just the scratch slab).
    out = jnp.dot(ctx_ref[...], wo_ref[...],
                  preferred_element_type=jnp.float32) + bo_ref[...]
    o_ref[...] = out.astype(o_ref.dtype)


def _vmem_budget_bytes():
    """~3/4 of this generation's per-core VMEM (headroom for compiler scratch)."""
    try:
        cap = pltpu.get_tpu_info().vmem_capacity_bytes
    except Exception:   # conservative fallback if the query is unavailable
        cap = 64 << 20
    return (int(cap) * 3) // 4


def _footprint_bytes(bb, seq, hidden, num_heads):
    """fp32 per-step VMEM estimate: weights + pipelined tiles + live intermediates."""
    fixed = 2 * 4 * (4 * hidden * hidden + 4 * hidden)            # dbl-buffered W/b
    per_b = 4 * (2 * (4 * seq * hidden + num_heads * seq * seq)   # dbl-buffered q/k/v/o + attn tiles
                 + 4 * seq * hidden                                # Q/K/V projections + ctx scratch
                 + 3 * num_heads * seq * seq)                      # in-flight energy/p/attn
    return fixed, per_b * bb


def _pick_batch_block(batch, seq, hidden, num_heads, budget_bytes):
    """Largest divisor of `batch` fitting the budget, capped at B/2 (>=2 grid steps)."""
    fixed, per_b = _footprint_bytes(1, seq, hidden, num_heads)
    avail = max(budget_bytes - fixed, per_b)
    bb = max(1, min(batch, avail // per_b))
    bb = max(1, min(bb, max(1, batch // 2)))   # keep >=2 parallel steps for v7x's 2 TCs
    while batch % bb:
        bb -= 1
    return bb


def multi_head_attention(query, key, value, params, *, num_heads,
                         batch_block=None, return_attention=True):
    """query/key/value: [B, S, H] float32. params: dict of torch-layout weights."""
    B, S, H = query.shape
    head_dim = H // num_heads
    scale = 1.0 / (head_dim ** 0.5)

    vmem_budget = _vmem_budget_bytes()
    if batch_block is None:
        batch_block = _pick_batch_block(B, S, H, num_heads, vmem_budget)
    assert B % batch_block == 0
    Bb = batch_block

    # torch Linear: y = x @ W.T + b. Keep weights unsplit (lane-dense matmuls);
    # fold the attention scale into the query projection (free, done once).
    wq = params["wq"].T * scale
    bq = (params["bq"] * scale).reshape(1, H)
    wk = params["wk"].T
    bk = params["bk"].reshape(1, H)
    wv = params["wv"].T
    bv = params["bv"].reshape(1, H)
    wo = params["wo"].T
    bo = params["bo"].reshape(1, H)

    # Flatten batch+seq so every projection sees M = Bb*S rows per grid step.
    # (S and Bb*S should be multiples of 8 so the (Bb*S,H)->(Bb,S,H) views stay
    #  within sublane tiles; true for the shapes exercised here.)
    q2 = query.reshape(B * S, H)
    k2 = key.reshape(B * S, H)
    v2 = value.reshape(B * S, H)

    kernel = functools.partial(_mha_kernel, num_heads=num_heads, head_dim=head_dim,
                               batch_block=Bb, seq_len=S,
                               return_attention=return_attention)

    seq_spec = pl.BlockSpec((Bb * S, H), lambda b: (b, 0))
    w_spec = pl.BlockSpec((H, H), lambda b: (0, 0))
    b_spec = pl.BlockSpec((1, H), lambda b: (0, 0))

    out_shape = [jax.ShapeDtypeStruct((B * S, H), jnp.float32)]
    out_specs = [pl.BlockSpec((Bb * S, H), lambda b: (b, 0))]
    if return_attention:
        out_shape.append(jax.ShapeDtypeStruct((B, num_heads, S, S), jnp.float32))
        out_specs.append(pl.BlockSpec((Bb, num_heads, S, S), lambda b: (b, 0, 0, 0)))

    fixed, tiled = _footprint_bytes(Bb, S, H, num_heads)
    vmem_limit = int(min(vmem_budget, max(32 << 20, fixed + tiled + (8 << 20))))

    results = pl.pallas_call(
        kernel,
        out_shape=tuple(out_shape),
        grid_spec=pltpu.PrefetchScalarGridSpec(
            num_scalar_prefetch=0,
            grid=(B // Bb,),
            in_specs=[
                seq_spec, seq_spec, seq_spec,   # query, key, value (flattened)
                w_spec, b_spec,                  # fc_q (scale folded in)
                w_spec, b_spec,                  # fc_k
                w_spec, b_spec,                  # fc_v
                w_spec, b_spec,                  # fc_o
            ],
            out_specs=tuple(out_specs),
            scratch_shapes=[pltpu.VMEM((Bb * S, H), jnp.float32)],  # ctx slab
        ),
        compiler_params=pltpu.CompilerParams(
            dimension_semantics=("parallel",),
            vmem_limit_bytes=vmem_limit,
        ),
    )(q2, k2, v2, wq, bq, wk, bk, wv, bv, wo, bo)

    x = results[0].reshape(B, S, H)
    if return_attention:
        return x, results[1]
    return x


def _reference(query, key, value, params, *, num_heads):
    """Pure-JAX reference mirroring the PyTorch forward (mask=None)."""
    B, S, H = query.shape
    hd = H // num_heads

    def lin(x, w, b):
        return x @ w.T + b

    Q = lin(query, params["wq"], params["bq"]).reshape(B, S, num_heads, hd).transpose(0, 2, 1, 3)
    K = lin(key, params["wk"], params["bk"]).reshape(B, S, num_heads, hd).transpose(0, 2, 1, 3)
    V = lin(value, params["wv"], params["bv"]).reshape(B, S, num_heads, hd).transpose(0, 2, 1, 3)
    energy = jnp.einsum("bhqd,bhkd->bhqk", Q, K) / (hd ** 0.5)
    attn = jax.nn.softmax(energy, axis=-1)
    x = jnp.einsum("bhqk,bhkd->bhqd", attn, V).transpose(0, 2, 1, 3).reshape(B, S, H)
    x = lin(x, params["wo"], params["bo"])
    return x, attn


def _init_params(key, hidden_dim):
    """Deterministic init matching nn.Linear's uniform(-1/sqrt(in), 1/sqrt(in))."""
    bound = 1.0 / (hidden_dim ** 0.5)
    names = ["wq", "bq", "wk", "bk", "wv", "bv", "wo", "bo"]
    keys = jax.random.split(key, len(names))
    params = {}
    for n, k in zip(names, keys):
        shape = (hidden_dim, hidden_dim) if n.startswith("w") else (hidden_dim,)
        params[n] = jax.random.uniform(k, shape, jnp.float32, -bound, bound)
    return params


if __name__ == "__main__":
    B, S, H, NUM_HEADS = 2, 8, 32, 4

    root = jax.random.PRNGKey(0)
    kq, kk, kv, kp = jax.random.split(root, 4)
    query = jax.random.normal(kq, (B, S, H), jnp.float32)
    key_in = jax.random.normal(kk, (B, S, H), jnp.float32)
    value = jax.random.normal(kv, (B, S, H), jnp.float32)
    params = _init_params(kp, H)

    out, attn = multi_head_attention(query, key_in, value, params, num_heads=NUM_HEADS)
    out = jax.block_until_ready(out)
    attn = jax.block_until_ready(attn)

    ref_out, ref_attn = _reference(query, key_in, value, params, num_heads=NUM_HEADS)
    np.testing.assert_allclose(np.asarray(out), np.asarray(ref_out), rtol=1e-5, atol=1e-5)
    np.testing.assert_allclose(np.asarray(attn), np.asarray(ref_attn), rtol=1e-5, atol=1e-5)

    # Also exercise the attention-free fast path (dominant HBM writeback removed).
    out_only = multi_head_attention(query, key_in, value, params,
                                    num_heads=NUM_HEADS, return_attention=False)
    out_only = jax.block_until_ready(out_only)
    np.testing.assert_allclose(np.asarray(out_only), np.asarray(ref_out), rtol=1e-5, atol=1e-5)

    print("KERNEL_OK")
</pallas_src>

<mosaic_0001>
module attributes {stable_mosaic.version = 11 : i64} {
  func.func @_mha_kernel(%arg0: i32, %arg1: memref<8x32xf32, #tpu.memory_space<vmem>>, %arg2: memref<8x32xf32, #tpu.memory_space<vmem>>, %arg3: memref<8x32xf32, #tpu.memory_space<vmem>>, %arg4: memref<32x32xf32, #tpu.memory_space<vmem>>, %arg5: memref<1x32xf32, #tpu.memory_space<vmem>>, %arg6: memref<32x32xf32, #tpu.memory_space<vmem>>, %arg7: memref<1x32xf32, #tpu.memory_space<vmem>>, %arg8: memref<32x32xf32, #tpu.memory_space<vmem>>, %arg9: memref<1x32xf32, #tpu.memory_space<vmem>>, %arg10: memref<32x32xf32, #tpu.memory_space<vmem>>, %arg11: memref<1x32xf32, #tpu.memory_space<vmem>>, %arg12: memref<8x32xf32, #tpu.memory_space<vmem>>, %arg13: memref<1x4x8x8xf32, #tpu.memory_space<vmem>>, %arg14: memref<8x32xf32, #tpu.memory_space<vmem>>) attributes {dimension_semantics = [#tpu.dimension_semantics<parallel>], iteration_bounds = array<i64: 2>, scalar_prefetch = 0 : i64, scratch_operands = 1 : i64, tpu.core_type = #tpu.core_type<tc>, window_params = [{transform_indices = @transform_0, window_bounds = array<i64: 8, 32>}, {transform_indices = @transform_1, window_bounds = array<i64: 8, 32>}, {transform_indices = @transform_2, window_bounds = array<i64: 8, 32>}, {pipeline_mode = #tpu.pipeline_mode<synchronous>, transform_indices = @transform_3, window_bounds = array<i64: 32, 32>}, {pipeline_mode = #tpu.pipeline_mode<synchronous>, transform_indices = @transform_4, window_bounds = array<i64: 1, 32>}, {pipeline_mode = #tpu.pipeline_mode<synchronous>, transform_indices = @transform_5, window_bounds = array<i64: 32, 32>}, {pipeline_mode = #tpu.pipeline_mode<synchronous>, transform_indices = @transform_6, window_bounds = array<i64: 1, 32>}, {pipeline_mode = #tpu.pipeline_mode<synchronous>, transform_indices = @transform_7, window_bounds = array<i64: 32, 32>}, {pipeline_mode = #tpu.pipeline_mode<synchronous>, transform_indices = @transform_8, window_bounds = array<i64: 1, 32>}, {pipeline_mode = #tpu.pipeline_mode<synchronous>, transform_indices = @transform_9, window_bounds = array<i64: 32, 32>}, {pipeline_mode = #tpu.pipeline_mode<synchronous>, transform_indices = @transform_10, window_bounds = array<i64: 1, 32>}, {transform_indices = @transform_11, window_bounds = array<i64: 8, 32>}, {transform_indices = @transform_12, window_bounds = array<i64: 1, 4, 8, 8>}]} {
    %c0 = arith.constant 0 : index
    %c0_0 = arith.constant 0 : index
    %0 = vector.load %arg1[%c0, %c0_0] : memref<8x32xf32, #tpu.memory_space<vmem>>, vector<8x32xf32>
    %c0_1 = arith.constant 0 : index
    %c0_2 = arith.constant 0 : index
    %1 = vector.load %arg2[%c0_1, %c0_2] : memref<8x32xf32, #tpu.memory_space<vmem>>, vector<8x32xf32>
    %c0_3 = arith.constant 0 : index
    %c0_4 = arith.constant 0 : index
    %2 = vector.load %arg3[%c0_3, %c0_4] : memref<8x32xf32, #tpu.memory_space<vmem>>, vector<8x32xf32>
    %c0_5 = arith.constant 0 : index
    %c0_6 = arith.constant 0 : index
    %3 = vector.load %arg4[%c0_5, %c0_6] : memref<32x32xf32, #tpu.memory_space<vmem>>, vector<32x32xf32>
    %cst = arith.constant dense<0.000000e+00> : vector<8x32xf32>
    %4 = tpu.matmul %0, %3, %cst {dimension_numbers = #tpu.dot_dimension_numbers<[1], [0], [0], [1], [0, 0, 1, 1], [], []>} : vector<8x32xf32>, vector<32x32xf32>, vector<8x32xf32> -> vector<8x32xf32>
    %c0_7 = arith.constant 0 : index
    %c0_8 = arith.constant 0 : index
    %5 = vector.load %arg5[%c0_7, %c0_8] : memref<1x32xf32, #tpu.memory_space<vmem>>, vector<1x32xf32>
    %6 = vector.broadcast %5 : vector<1x32xf32> to vector<8x32xf32>
    %7 = arith.addf %4, %6 : vector<8x32xf32>
    %8 = vector.shape_cast %7 : vector<8x32xf32> to vector<1x8x32xf32>
    %c0_9 = arith.constant 0 : index
    %c0_10 = arith.constant 0 : index
    %9 = vector.load %arg6[%c0_9, %c0_10] : memref<32x32xf32, #tpu.memory_space<vmem>>, vector<32x32xf32>
    %cst_11 = arith.constant dense<0.000000e+00> : vector<8x32xf32>
    %10 = tpu.matmul %1, %9, %cst_11 {dimension_numbers = #tpu.dot_dimension_numbers<[1], [0], [0], [1], [0, 0, 1, 1], [], []>} : vector<8x32xf32>, vector<32x32xf32>, vector<8x32xf32> -> vector<8x32xf32>
    %c0_12 = arith.constant 0 : index
    %c0_13 = arith.constant 0 : index
    %11 = vector.load %arg7[%c0_12, %c0_13] : memref<1x32xf32, #tpu.memory_space<vmem>>, vector<1x32xf32>
    %12 = vector.broadcast %11 : vector<1x32xf32> to vector<8x32xf32>
    %13 = arith.addf %10, %12 : vector<8x32xf32>
    %14 = vector.shape_cast %13 : vector<8x32xf32> to vector<1x8x32xf32>
    %c0_14 = arith.constant 0 : index
    %c0_15 = arith.constant 0 : index
    %15 = vector.load %arg8[%c0_14, %c0_15] : memref<32x32xf32, #tpu.memory_space<vmem>>, vector<32x32xf32>
    %cst_16 = arith.constant dense<0.000000e+00> : vector<8x32xf32>
    %16 = tpu.matmul %2, %15, %cst_16 {dimension_numbers = #tpu.dot_dimension_numbers<[1], [0], [0], [1], [0, 0, 1, 1], [], []>} : vector<8x32xf32>, vector<32x32xf32>, vector<8x32xf32> -> vector<8x32xf32>
    %c0_17 = arith.constant 0 : index
    %c0_18 = arith.constant 0 : index
    %17 = vector.load %arg9[%c0_17, %c0_18] : memref<1x32xf32, #tpu.memory_space<vmem>>, vector<1x32xf32>
    %18 = vector.broadcast %17 : vector<1x32xf32> to vector<8x32xf32>
    %19 = arith.addf %16, %18 : vector<8x32xf32>
    %20 = vector.shape_cast %19 : vector<8x32xf32> to vector<1x8x32xf32>
    %21 = vector.extract_strided_slice %8 {offsets = [0, 0, 0], sizes = [1, 8, 8], strides = [1, 1, 1]} : vector<1x8x32xf32> to vector<1x8x8xf32>
    %22 = vector.extract_strided_slice %14 {offsets = [0, 0, 0], sizes = [1, 8, 8], strides = [1, 1, 1]} : vector<1x8x32xf32> to vector<1x8x8xf32>
    %23 = vector.extract_strided_slice %20 {offsets = [0, 0, 0], sizes = [1, 8, 8], strides = [1, 1, 1]} : vector<1x8x32xf32> to vector<1x8x8xf32>
    "tpu.trace_start"() <{level = 10 : i32, message = "bqd,bkd->bqk"}> : () -> ()
    %cst_19 = arith.constant dense<0.000000e+00> : vector<1x8x8xf32>
    %24 = tpu.matmul %21, %22, %cst_19 {dimension_numbers = #tpu.dot_dimension_numbers<[2], [2], [1], [1], [0, 0, 0, 1, 1, 1], [0], [0]>} : vector<1x8x8xf32>, vector<1x8x8xf32>, vector<1x8x8xf32> -> vector<1x8x8xf32>
    "tpu.trace_stop"() : () -> ()
    %cst_20 = arith.constant dense<0xFF800000> : vector<1x8xf32>
    %25 = vector.multi_reduction <maximumf>, %24, %cst_20 [2] : vector<1x8x8xf32> to vector<1x8xf32>
    %26 = vector.shape_cast %25 : vector<1x8xf32> to vector<1x8x1xf32>
    %27 = vector.broadcast %26 : vector<1x8x1xf32> to vector<1x8x8xf32>
    %28 = arith.subf %24, %27 : vector<1x8x8xf32>
    %29 = math.exp %28 : vector<1x8x8xf32>
    %cst_21 = arith.constant dense<0.000000e+00> : vector<1x8xf32>
    %30 = vector.multi_reduction <add>, %29, %cst_21 [2] : vector<1x8x8xf32> to vector<1x8xf32>
    %31 = vector.shape_cast %30 : vector<1x8xf32> to vector<1x8x1xf32>
    %32 = tpu.reciprocal %31 : vector<1x8x1xf32> -> vector<1x8x1xf32>
    %33 = vector.broadcast %32 : vector<1x8x1xf32> to vector<1x8x8xf32>
    %34 = arith.mulf %29, %33 : vector<1x8x8xf32>
    %c0_22 = arith.constant 0 : index
    %c0_23 = arith.constant 0 : index
    %c0_24 = arith.constant 0 : index
    %c0_25 = arith.constant 0 : index
    %35 = vector.load %arg13[%c0_22, %c0_23, %c0_24, %c0_25] : memref<1x4x8x8xf32, #tpu.memory_space<vmem>>, vector<1x1x8x8xf32>
    %36 = vector.shape_cast %35 : vector<1x1x8x8xf32> to vector<1x8x8xf32>
    %37 = vector.shape_cast %34 : vector<1x8x8xf32> to vector<1x1x8x8xf32>
    tpu.vector_store %arg13[%c0_22, %c0_23, %c0_24, %c0_25], %37 {strides = array<i32>} : memref<1x4x8x8xf32, #tpu.memory_space<vmem>>, vector<1x1x8x8xf32>,
    "tpu.trace_start"() <{level = 10 : i32, message = "bqk,bkd->bqd"}> : () -> ()
    %cst_26 = arith.constant dense<0.000000e+00> : vector<1x8x8xf32>
    %38 = tpu.matmul %34, %23, %cst_26 {dimension_numbers = #tpu.dot_dimension_numbers<[2], [1], [1], [2], [0, 0, 0, 1, 1, 2], [0], [0]>} : vector<1x8x8xf32>, vector<1x8x8xf32>, vector<1x8x8xf32> -> vector<1x8x8xf32>
    "tpu.trace_stop"() : () -> ()
    %39 = vector.shape_cast %38 : vector<1x8x8xf32> to vector<8x8xf32>
    %c0_27 = arith.constant 0 : index
    %c0_28 = arith.constant 0 : index
    %40 = vector.load %arg14[%c0_27, %c0_28] : memref<8x32xf32, #tpu.memory_space<vmem>>, vector<8x8xf32>
    tpu.vector_store %arg14[%c0_27, %c0_28], %39 {strides = array<i32>} : memref<8x32xf32, #tpu.memory_space<vmem>>, vector<8x8xf32>,
    %41 = vector.extract_strided_slice %8 {offsets = [0, 0, 8], sizes = [1, 8, 8], strides = [1, 1, 1]} : vector<1x8x32xf32> to vector<1x8x8xf32>
    %42 = vector.extract_strided_slice %14 {offsets = [0, 0, 8], sizes = [1, 8, 8], strides = [1, 1, 1]} : vector<1x8x32xf32> to vector<1x8x8xf32>
    %43 = vector.extract_strided_slice %20 {offsets = [0, 0, 8], sizes = [1, 8, 8], strides = [1, 1, 1]} : vector<1x8x32xf32> to vector<1x8x8xf32>
    "tpu.trace_start"() <{level = 10 : i32, message = "bqd,bkd->bqk"}> : () -> ()
    %cst_29 = arith.constant dense<0.000000e+00> : vector<1x8x8xf32>
    %44 = tpu.matmul %41, %42, %cst_29 {dimension_numbers = #tpu.dot_dimension_numbers<[2], [2], [1], [1], [0, 0, 0, 1, 1, 1], [0], [0]>} : vector<1x8x8xf32>, vector<1x8x8xf32>, vector<1x8x8xf32> -> vector<1x8x8xf32>
    "tpu.trace_stop"() : () -> ()
    %cst_30 = arith.constant dense<0xFF800000> : vector<1x8xf32>
    %45 = vector.multi_reduction <maximumf>, %44, %cst_30 [2] : vector<1x8x8xf32> to vector<1x8xf32>
    %46 = vector.shape_cast %45 : vector<1x8xf32> to vector<1x8x1xf32>
    %47 = vector.broadcast %46 : vector<1x8x1xf32> to vector<1x8x8xf32>
    %48 = arith.subf %44, %47 : vector<1x8x8xf32>
    %49 = math.exp %48 : vector<1x8x8xf32>
    %cst_31 = arith.constant dense<0.000000e+00> : vector<1x8xf32>
    %50 = vector.multi_reduction <add>, %49, %cst_31 [2] : vector<1x8x8xf32> to vector<1x8xf32>
    %51 = vector.shape_cast %50 : vector<1x8xf32> to vector<1x8x1xf32>
    %52 = tpu.reciprocal %51 : vector<1x8x1xf32> -> vector<1x8x1xf32>
    %53 = vector.broadcast %52 : vector<1x8x1xf32> to vector<1x8x8xf32>
    %54 = arith.mulf %49, %53 : vector<1x8x8xf32>
    %c0_32 = arith.constant 0 : index
    %c1 = arith.constant 1 : index
    %c0_33 = arith.constant 0 : index
    %c0_34 = arith.constant 0 : index
    %55 = vector.load %arg13[%c0_32, %c1, %c0_33, %c0_34] : memref<1x4x8x8xf32, #tpu.memory_space<vmem>>, vector<1x1x8x8xf32>
    %56 = vector.shape_cast %55 : vector<1x1x8x8xf32> to vector<1x8x8xf32>
    %57 = vector.shape_cast %54 : vector<1x8x8xf32> to vector<1x1x8x8xf32>
    tpu.vector_store %arg13[%c0_32, %c1, %c0_33, %c0_34], %57 {strides = array<i32>} : memref<1x4x8x8xf32, #tpu.memory_space<vmem>>, vector<1x1x8x8xf32>,
    "tpu.trace_start"() <{level = 10 : i32, message = "bqk,bkd->bqd"}> : () -> ()
    %cst_35 = arith.constant dense<0.000000e+00> : vector<1x8x8xf32>
    %58 = tpu.matmul %54, %43, %cst_35 {dimension_numbers = #tpu.dot_dimension_numbers<[2], [1], [1], [2], [0, 0, 0, 1, 1, 2], [0], [0]>} : vector<1x8x8xf32>, vector<1x8x8xf32>, vector<1x8x8xf32> -> vector<1x8x8xf32>
    "tpu.trace_stop"() : () -> ()
    %59 = vector.shape_cast %58 : vector<1x8x8xf32> to vector<8x8xf32>
    %c0_36 = arith.constant 0 : index
    %c8 = arith.constant 8 : index
    %60 = vector.load %arg14[%c0_36, %c8] : memref<8x32xf32, #tpu.memory_space<vmem>>, vector<8x8xf32>
    tpu.vector_store %arg14[%c0_36, %c8], %59 {strides = array<i32>} : memref<8x32xf32, #tpu.memory_space<vmem>>, vector<8x8xf32>,
    %61 = vector.extract_strided_slice %8 {offsets = [0, 0, 16], sizes = [1, 8, 8], strides = [1, 1, 1]} : vector<1x8x32xf32> to vector<1x8x8xf32>
    %62 = vector.extract_strided_slice %14 {offsets = [0, 0, 16], sizes = [1, 8, 8], strides = [1, 1, 1]} : vector<1x8x32xf32> to vector<1x8x8xf32>
    %63 = vector.extract_strided_slice %20 {offsets = [0, 0, 16], sizes = [1, 8, 8], strides = [1, 1, 1]} : vector<1x8x32xf32> to vector<1x8x8xf32>
    "tpu.trace_start"() <{level = 10 : i32, message = "bqd,bkd->bqk"}> : () -> ()
    %cst_37 = arith.constant dense<0.000000e+00> : vector<1x8x8xf32>
    %64 = tpu.matmul %61, %62, %cst_37 {dimension_numbers = #tpu.dot_dimension_numbers<[2], [2], [1], [1], [0, 0, 0, 1, 1, 1], [0], [0]>} : vector<1x8x8xf32>, vector<1x8x8xf32>, vector<1x8x8xf32> -> vector<1x8x8xf32>
    "tpu.trace_stop"() : () -> ()
    %cst_38 = arith.constant dense<0xFF800000> : vector<1x8xf32>
    %65 = vector.multi_reduction <maximumf>, %64, %cst_38 [2] : vector<1x8x8xf32> to vector<1x8xf32>
    %66 = vector.shape_cast %65 : vector<1x8xf32> to vector<1x8x1xf32>
    %67 = vector.broadcast %66 : vector<1x8x1xf32> to vector<1x8x8xf32>
    %68 = arith.subf %64, %67 : vector<1x8x8xf32>
    %69 = math.exp %68 : vector<1x8x8xf32>
    %cst_39 = arith.constant dense<0.000000e+00> : vector<1x8xf32>
    %70 = vector.multi_reduction <add>, %69, %cst_39 [2] : vector<1x8x8xf32> to vector<1x8xf32>
    %71 = vector.shape_cast %70 : vector<1x8xf32> to vector<1x8x1xf32>
    %72 = tpu.reciprocal %71 : vector<1x8x1xf32> -> vector<1x8x1xf32>
    %73 = vector.broadcast %72 : vector<1x8x1xf32> to vector<1x8x8xf32>
    %74 = arith.mulf %69, %73 : vector<1x8x8xf32>
    %c0_40 = arith.constant 0 : index
    %c2 = arith.constant 2 : index
    %c0_41 = arith.constant 0 : index
    %c0_42 = arith.constant 0 : index
    %75 = vector.load %arg13[%c0_40, %c2, %c0_41, %c0_42] : memref<1x4x8x8xf32, #tpu.memory_space<vmem>>, vector<1x1x8x8xf32>
    %76 = vector.shape_cast %75 : vector<1x1x8x8xf32> to vector<1x8x8xf32>
    %77 = vector.shape_cast %74 : vector<1x8x8xf32> to vector<1x1x8x8xf32>
    tpu.vector_store %arg13[%c0_40, %c2, %c0_41, %c0_42], %77 {strides = array<i32>} : memref<1x4x8x8xf32, #tpu.memory_space<vmem>>, vector<1x1x8x8xf32>,
    "tpu.trace_start"() <{level = 10 : i32, message = "bqk,bkd->bqd"}> : () -> ()
    %cst_43 = arith.constant dense<0.000000e+00> : vector<1x8x8xf32>
    %78 = tpu.matmul %74, %63, %cst_43 {dimension_numbers = #tpu.dot_dimension_numbers<[2], [1], [1], [2], [0, 0, 0, 1, 1, 2], [0], [0]>} : vector<1x8x8xf32>, vector<1x8x8xf32>, vector<1x8x8xf32> -> vector<1x8x8xf32>
    "tpu.trace_stop"() : () -> ()
    %79 = vector.shape_cast %78 : vector<1x8x8xf32> to vector<8x8xf32>
    %c0_44 = arith.constant 0 : index
    %c16 = arith.constant 16 : index
    %80 = vector.load %arg14[%c0_44, %c16] : memref<8x32xf32, #tpu.memory_space<vmem>>, vector<8x8xf32>
    tpu.vector_store %arg14[%c0_44, %c16], %79 {strides = array<i32>} : memref<8x32xf32, #tpu.memory_space<vmem>>, vector<8x8xf32>,
    %81 = vector.extract_strided_slice %8 {offsets = [0, 0, 24], sizes = [1, 8, 8], strides = [1, 1, 1]} : vector<1x8x32xf32> to vector<1x8x8xf32>
    %82 = vector.extract_strided_slice %14 {offsets = [0, 0, 24], sizes = [1, 8, 8], strides = [1, 1, 1]} : vector<1x8x32xf32> to vector<1x8x8xf32>
    %83 = vector.extract_strided_slice %20 {offsets = [0, 0, 24], sizes = [1, 8, 8], strides = [1, 1, 1]} : vector<1x8x32xf32> to vector<1x8x8xf32>
    "tpu.trace_start"() <{level = 10 : i32, message = "bqd,bkd->bqk"}> : () -> ()
    %cst_45 = arith.constant dense<0.000000e+00> : vector<1x8x8xf32>
    %84 = tpu.matmul %81, %82, %cst_45 {dimension_numbers = #tpu.dot_dimension_numbers<[2], [2], [1], [1], [0, 0, 0, 1, 1, 1], [0], [0]>} : vector<1x8x8xf32>, vector<1x8x8xf32>, vector<1x8x8xf32> -> vector<1x8x8xf32>
    "tpu.trace_stop"() : () -> ()
    %cst_46 = arith.constant dense<0xFF800000> : vector<1x8xf32>
    %85 = vector.multi_reduction <maximumf>, %84, %cst_46 [2] : vector<1x8x8xf32> to vector<1x8xf32>
    %86 = vector.shape_cast %85 : vector<1x8xf32> to vector<1x8x1xf32>
    %87 = vector.broadcast %86 : vector<1x8x1xf32> to vector<1x8x8xf32>
    %88 = arith.subf %84, %87 : vector<1x8x8xf32>
    %89 = math.exp %88 : vector<1x8x8xf32>
    %cst_47 = arith.constant dense<0.000000e+00> : vector<1x8xf32>
    %90 = vector.multi_reduction <add>, %89, %cst_47 [2] : vector<1x8x8xf32> to vector<1x8xf32>
    %91 = vector.shape_cast %90 : vector<1x8xf32> to vector<1x8x1xf32>
    %92 = tpu.reciprocal %91 : vector<1x8x1xf32> -> vector<1x8x1xf32>
    %93 = vector.broadcast %92 : vector<1x8x1xf32> to vector<1x8x8xf32>
    %94 = arith.mulf %89, %93 : vector<1x8x8xf32>
    %c0_48 = arith.constant 0 : index
    %c3 = arith.constant 3 : index
    %c0_49 = arith.constant 0 : index
    %c0_50 = arith.constant 0 : index
    %95 = vector.load %arg13[%c0_48, %c3, %c0_49, %c0_50] : memref<1x4x8x8xf32, #tpu.memory_space<vmem>>, vector<1x1x8x8xf32>
    %96 = vector.shape_cast %95 : vector<1x1x8x8xf32> to vector<1x8x8xf32>
    %97 = vector.shape_cast %94 : vector<1x8x8xf32> to vector<1x1x8x8xf32>
    tpu.vector_store %arg13[%c0_48, %c3, %c0_49, %c0_50], %97 {strides = array<i32>} : memref<1x4x8x8xf32, #tpu.memory_space<vmem>>, vector<1x1x8x8xf32>,
    "tpu.trace_start"() <{level = 10 : i32, message = "bqk,bkd->bqd"}> : () -> ()
    %cst_51 = arith.constant dense<0.000000e+00> : vector<1x8x8xf32>
    %98 = tpu.matmul %94, %83, %cst_51 {dimension_numbers = #tpu.dot_dimension_numbers<[2], [1], [1], [2], [0, 0, 0, 1, 1, 2], [0], [0]>} : vector<1x8x8xf32>, vector<1x8x8xf32>, vector<1x8x8xf32> -> vector<1x8x8xf32>
    "tpu.trace_stop"() : () -> ()
    %99 = vector.shape_cast %98 : vector<1x8x8xf32> to vector<8x8xf32>
    %c0_52 = arith.constant 0 : index
    %c24 = arith.constant 24 : index
    %100 = vector.load %arg14[%c0_52, %c24] : memref<8x32xf32, #tpu.memory_space<vmem>>, vector<8x8xf32>
    tpu.vector_store %arg14[%c0_52, %c24], %99 {strides = array<i32>} : memref<8x32xf32, #tpu.memory_space<vmem>>, vector<8x8xf32>,
    %c0_53 = arith.constant 0 : index
    %c0_54 = arith.constant 0 : index
    %101 = vector.load %arg14[%c0_53, %c0_54] : memref<8x32xf32, #tpu.memory_space<vmem>>, vector<8x32xf32>
    %c0_55 = arith.constant 0 : index
    %c0_56 = arith.constant 0 : index
    %102 = vector.load %arg10[%c0_55, %c0_56] : memref<32x32xf32, #tpu.memory_space<vmem>>, vector<32x32xf32>
    %cst_57 = arith.constant dense<0.000000e+00> : vector<8x32xf32>
    %103 = tpu.matmul %101, %102, %cst_57 {dimension_numbers = #tpu.dot_dimension_numbers<[1], [0], [0], [1], [0, 0, 1, 1], [], []>} : vector<8x32xf32>, vector<32x32xf32>, vector<8x32xf32> -> vector<8x32xf32>
    %c0_58 = arith.constant 0 : index
    %c0_59 = arith.constant 0 : index
    %104 = vector.load %arg11[%c0_58, %c0_59] : memref<1x32xf32, #tpu.memory_space<vmem>>, vector<1x32xf32>
    %105 = vector.broadcast %104 : vector<1x32xf32> to vector<8x32xf32>
    %106 = arith.addf %103, %105 : vector<8x32xf32>
    %c0_60 = arith.constant 0 : index
    %c0_61 = arith.constant 0 : index
    %107 = vector.load %arg12[%c0_60, %c0_61] : memref<8x32xf32, #tpu.memory_space<vmem>>, vector<8x32xf32>
    tpu.vector_store %arg12[%c0_60, %c0_61], %106 {strides = array<i32>} : memref<8x32xf32, #tpu.memory_space<vmem>>, vector<8x32xf32>,
    return
  }
  func.func @transform_0(%arg0: i32) -> (i32, i32) {
    %c0_i32 = arith.constant 0 : i32
    %c0_i32_0 = arith.constant 0 : i32
    return %arg0, %c0_i32 : i32, i32
  }
  func.func @transform_1(%arg0: i32) -> (i32, i32) {
    %c0_i32 = arith.constant 0 : i32
    %c0_i32_0 = arith.constant 0 : i32
    return %arg0, %c0_i32 : i32, i32
  }
  func.func @transform_2(%arg0: i32) -> (i32, i32) {
    %c0_i32 = arith.constant 0 : i32
    %c0_i32_0 = arith.constant 0 : i32
    return %arg0, %c0_i32 : i32, i32
  }
  func.func @transform_3(%arg0: i32) -> (i32, i32) {
    %c0_i32 = arith.constant 0 : i32
    %c0_i32_0 = arith.constant 0 : i32
    %c0_i32_1 = arith.constant 0 : i32
    return %c0_i32, %c0_i32_0 : i32, i32
  }
  func.func @transform_4(%arg0: i32) -> (i32, i32) {
    %c0_i32 = arith.constant 0 : i32
    %c0_i32_0 = arith.constant 0 : i32
    %c0_i32_1 = arith.constant 0 : i32
    return %c0_i32, %c0_i32_0 : i32, i32
  }
  func.func @transform_5(%arg0: i32) -> (i32, i32) {
    %c0_i32 = arith.constant 0 : i32
    %c0_i32_0 = arith.constant 0 : i32
    %c0_i32_1 = arith.constant 0 : i32
    return %c0_i32, %c0_i32_0 : i32, i32
  }
  func.func @transform_6(%arg0: i32) -> (i32, i32) {
    %c0_i32 = arith.constant 0 : i32
    %c0_i32_0 = arith.constant 0 : i32
    %c0_i32_1 = arith.constant 0 : i32
    return %c0_i32, %c0_i32_0 : i32, i32
  }
  func.func @transform_7(%arg0: i32) -> (i32, i32) {
    %c0_i32 = arith.constant 0 : i32
    %c0_i32_0 = arith.constant 0 : i32
    %c0_i32_1 = arith.constant 0 : i32
    return %c0_i32, %c0_i32_0 : i32, i32
  }
  func.func @transform_8(%arg0: i32) -> (i32, i32) {
    %c0_i32 = arith.constant 0 : i32
    %c0_i32_0 = arith.constant 0 : i32
    %c0_i32_1 = arith.constant 0 : i32
    return %c0_i32, %c0_i32_0 : i32, i32
  }
  func.func @transform_9(%arg0: i32) -> (i32, i32) {
    %c0_i32 = arith.constant 0 : i32
    %c0_i32_0 = arith.constant 0 : i32
    %c0_i32_1 = arith.constant 0 : i32
    return %c0_i32, %c0_i32_0 : i32, i32
  }
  func.func @transform_10(%arg0: i32) -> (i32, i32) {
    %c0_i32 = arith.constant 0 : i32
    %c0_i32_0 = arith.constant 0 : i32
    %c0_i32_1 = arith.constant 0 : i32
    return %c0_i32, %c0_i32_0 : i32, i32
  }
  func.func @transform_11(%arg0: i32) -> (i32, i32) {
    %c0_i32 = arith.constant 0 : i32
    %c0_i32_0 = arith.constant 0 : i32
    return %arg0, %c0_i32 : i32, i32
  }
  func.func @transform_12(%arg0: i32) -> (i32, i32, i32, i32) {
    %c0_i32 = arith.constant 0 : i32
    %c0_i32_0 = arith.constant 0 : i32
    %c0_i32_1 = arith.constant 0 : i32
    %c0_i32_2 = arith.constant 0 : i32
    return %arg0, %c0_i32, %c0_i32_0, %c0_i32_1 : i32, i32, i32, i32
  }
}

</mosaic_0001>

<llo_original>
// kernel: tpu_custom_call.1
$region0: #{tpu_custom_call.1}
  #allocation0 [shape = 'u32[]', space=smem, size = 0x4, offset = 0x4, fixed_abs, tag = 'smem constant byte address 0x4 - core index']
  #allocation1 [shape = 'u32[72,128]{1,0:T(1,128)}', space=vmem, size = 0x9000, scoped, tag = 'internal scratch']
  #allocation2 [shape = 'f32[8,32]{1,0:T(8,128)}', space=vmem, size = 0x1000, scoped, tag = 'scratch operand']
  %s0 = inlined_call_operand.hbm [shape: f32[16,32], index: 0, kind: input, shape index: {}]
  %s1 = inlined_call_operand.hbm [shape: f32[16,32], index: 1, kind: input, shape index: {}]
  %s2 = inlined_call_operand.hbm [shape: f32[16,32], index: 2, kind: input, shape index: {}]
  %s3 = inlined_call_operand.hbm [shape: f32[32,32], index: 3, kind: input, shape index: {}]
  %s4 = inlined_call_operand.vmem [shape: f32[1,32], index: 4, kind: input, shape index: {}]
  %s5 = inlined_call_operand.hbm [shape: f32[32,32], index: 5, kind: input, shape index: {}]
  %s6 = inlined_call_operand.vmem [shape: f32[1,32], index: 6, kind: input, shape index: {}]
  %s7 = inlined_call_operand.hbm [shape: f32[32,32], index: 7, kind: input, shape index: {}]
  %s8 = inlined_call_operand.vmem [shape: f32[1,32], index: 8, kind: input, shape index: {}]
  %s9 = inlined_call_operand.hbm [shape: f32[32,32], index: 9, kind: input, shape index: {}]
  %s10 = inlined_call_operand.vmem [shape: f32[1,32], index: 10, kind: input, shape index: {}]
  %s11 = inlined_call_operand.hbm [shape: f32[16,32], index: 11, kind: output, shape index: {0}]
  %s12 = inlined_call_operand.hbm [shape: f32[2,4,8,8], index: 12, kind: output, shape index: {1}]
  %13 = xla_tuple %s11, %s12
  %s14 = sld [smem:[#allocation0]]
  $region113: #{tpu_custom_call.1} parent=0
    _
  %s16 = ssub.s32 1, %s14
  %s17 = scalar_select 0, %s16, %s14
  $region1: #{tpu_custom_call.1} parent=0
    #allocation3 [shape = 'u8[8192]{0}', space=vmem, size = 0x2000, scoped, tag = 'input window, operand 0']
    #allocation4 [shape = 's32[2]{0}', space=sflag, size = 0x8, scoped, tag = 'scoped memory for tpu_custom_call.1']
    #allocation5 [shape = 's32[2]{0}', space=sflag, size = 0x8, scoped, tag = 'scoped memory for tpu_custom_call.1']
    #allocation6 [shape = 'u8[8192]{0}', space=vmem, size = 0x2000, scoped, tag = 'input window, operand 1']
    #allocation7 [shape = 's32[2]{0}', space=sflag, size = 0x8, scoped, tag = 'scoped memory for tpu_custom_call.1']
    #allocation8 [shape = 'u8[8192]{0}', space=vmem, size = 0x2000, scoped, tag = 'input window, operand 2']
    #allocation9 [shape = 'u8[16384]{0}', space=vmem, size = 0x4000, scoped, tag = 'input window, operand 3, single buffered']
    #allocation10 [shape = 's32[1]{0}', space=sflag, size = 0x4, scoped, tag = 'scoped memory for tpu_custom_call.1']
    #allocation11 [shape = 'u8[16384]{0}', space=vmem, size = 0x4000, scoped, tag = 'input window, operand 5, single buffered']
    #allocation12 [shape = 'u8[16384]{0}', space=vmem, size = 0x4000, scoped, tag = 'input window, operand 7, single buffered']
    #allocation13 [shape = 's32[1]{0}', space=sflag, size = 0x4, scoped, tag = 'scoped memory for tpu_custom_call.1']
    #allocation14 [shape = 'u8[16384]{0}', space=vmem, size = 0x4000, scoped, tag = 'input window, operand 9, single buffered']
    #allocation15 [shape = 'u8[8192]{0}', space=vmem, size = 0x2000, scoped, tag = 'output window, operand 0']
    #allocation16 [shape = 'u8[32768]{0}', space=vmem, size = 0x8000, scoped, tag = 'output window, operand 1']
    #allocation17 [shape = 's32[2]{0}', space=sflag, size = 0x8, scoped, tag = 'scoped memory for tpu_custom_call.1']
    %18 = vsyncpa [#allocation4], 0
    %s19 = scalar_lea.sflag [#allocation4], 1
    %20 = vsyncpa %s19, 0
    %21 = vsyncpa [#allocation7], 0
    %s22 = scalar_lea.sflag [#allocation7], 1
    %23 = vsyncpa %s22, 0
    %24 = vsyncpa [#allocation10], 0
    %25 = vsyncpa [#allocation13], 0
    %26 = vsyncpa [#allocation5], 0
    %s27 = scalar_lea.sflag [#allocation5], 1
    %28 = vsyncpa %s27, 0
    %29 = vsyncpa [#allocation17], 0
    %s30 = scalar_lea.sflag [#allocation17], 1
    %31 = vsyncpa %s30, 0
    loop: start=0, step=1, limit=4
    $region2: #{tpu_custom_call.1} parent=1 // loop_pre_header
      _
    $region3: #{tpu_custom_call.1} parent=1 // loop_header
      %s33 = sphi 0, %s37
      %p34 = scmp.ge.s32.totalorder %s33, 4
      %s43 = sphi 0, %s45
      %s46 = sphi 0, %s43
      %s47 = sphi 0, %s46
      %s63 = sphi 0, %s47
      %s69 = sphi 0, %s71
      %s72 = sphi 0, %s69
      %s73 = sphi 0, %s72
      %s89 = sphi 0, %s73
      %s95 = sphi 0, %s97
      %s98 = sphi 0, %s95
      %s99 = sphi 0, %s98
      %s115 = sphi 0, %s99
      %s119 = sphi 0, %s119
      %s121 = sphi 0, %s119
      %s122 = sphi 0, %s121
      %s136 = sphi 0, %s122
      %s140 = sphi 0, %s140
      %s142 = sphi 0, %s140
      %s143 = sphi 0, %s142
      %s157 = sphi 0, %s143
      %s161 = sphi 0, %s161
      %s163 = sphi 0, %s161
      %s164 = sphi 0, %s163
      %s178 = sphi 0, %s164
      %s182 = sphi 0, %s182
      %s184 = sphi 0, %s182
      %s185 = sphi 0, %s184
      %s199 = sphi 0, %s185
      %s203 = sphi 0, %s203
      %s205 = sphi 0, %s203
      %s206 = sphi 0, %s205
      %s220 = sphi 0, %s206
      %s224 = sphi 0, %s224
      %s226 = sphi 0, %s224
      %s227 = sphi 0, %s226
      %s241 = sphi 0, %s227
      %s245 = sphi 0, %s245
      %s247 = sphi 0, %s245
      %s248 = sphi 0, %s247
      %s262 = sphi 0, %s248
      %s266 = sphi 0, %s266
      %s268 = sphi 0, %s266
      %s269 = sphi 0, %s268
      %s283 = sphi 0, %s269
      %s289 = sphi 0, %s291
      %s292 = sphi 0, %s289
      %s293 = sphi 0, %s292
      %s309 = sphi 0, %s293
      %s315 = sphi 0, %s317
      %s318 = sphi 0, %s315
      %s319 = sphi 0, %s318
      %s335 = sphi 0, %s319
    $region4: #{tpu_custom_call.1} parent=1 // loop_header_branch
      %36 = sbr.rel (%p34) target = $region8
    $region5: #{tpu_custom_call.1} parent=1 // loop_body
      %s38 = ssub.s32 %s33, 1
      %s39 = ssub.s32 %s33, 2
      %s40 = sadd.s32 %s33, 1
      %s41 = ssub.s32 %s33, %s40
      %p42 = scmp.eq.s32.totalorder %s41, 0
      %s44 = sadd.s32 %s43, 1
      %s45 = scalar_select %p42, %s43, %s44
      %p48 = pneg %p42
      %p49 = scmp.eq.s32.totalorder %s33, 1
      %p50 = por %p48, %p49
      %p51 = scmp.ne.s32.totalorder %s43, %s46
      %p52 = scmp.eq.s32.totalorder %s33, 0
      %p53 = por %p51, %p52
      %p54 = scmp.ne.s32.totalorder %s43, %s46
      %p55 = scmp.eq.s32.totalorder %s38, 1
      %p56 = por %p54, %p55
      %p57 = scmp.ne.s32.totalorder %s46, %s47
      %p58 = scmp.eq.s32.totalorder %s38, 0
      %p59 = por %p57, %p58
      %p60 = scmp.ne.s32.totalorder %s46, %s47
      %p61 = scmp.eq.s32.totalorder %s39, 1
      %p62 = por %p60, %p61
      %p64 = scmp.ne.s32.totalorder %s47, %s63
      %p65 = scmp.eq.s32.totalorder %s39, 0
      %p66 = por %p64, %p65
      %s67 = ssub.s32 %s33, %s40
      %p68 = scmp.eq.s32.totalorder %s67, 0
      %s70 = sadd.s32 %s69, 1
      %s71 = scalar_select %p68, %s69, %s70
      %p74 = pneg %p68
      %p75 = scmp.eq.s32.totalorder %s33, 1
      %p76 = por %p74, %p75
      %p77 = scmp.ne.s32.totalorder %s69, %s72
      %p78 = scmp.eq.s32.totalorder %s33, 0
      %p79 = por %p77, %p78
      %p80 = scmp.ne.s32.totalorder %s69, %s72
      %p81 = scmp.eq.s32.totalorder %s38, 1
      %p82 = por %p80, %p81
      %p83 = scmp.ne.s32.totalorder %s72, %s73
      %p84 = scmp.eq.s32.totalorder %s38, 0
      %p85 = por %p83, %p84
      %p86 = scmp.ne.s32.totalorder %s72, %s73
      %p87 = scmp.eq.s32.totalorder %s39, 1
      %p88 = por %p86, %p87
      %p90 = scmp.ne.s32.totalorder %s73, %s89
      %p91 = scmp.eq.s32.totalorder %s39, 0
      %p92 = por %p90, %p91
      %s93 = ssub.s32 %s33, %s40
      %p94 = scmp.eq.s32.totalorder %s93, 0
      %s96 = sadd.s32 %s95, 1
      %s97 = scalar_select %p94, %s95, %s96
      %p100 = pneg %p94
      %p101 = scmp.eq.s32.totalorder %s33, 1
      %p102 = por %p100, %p101
      %p103 = scmp.ne.s32.totalorder %s95, %s98
      %p104 = scmp.eq.s32.totalorder %s33, 0
      %p105 = por %p103, %p104
      %p106 = scmp.ne.s32.totalorder %s95, %s98
      %p107 = scmp.eq.s32.totalorder %s38, 1
      %p108 = por %p106, %p107
      %p109 = scmp.ne.s32.totalorder %s98, %s99
      %p110 = scmp.eq.s32.totalorder %s38, 0
      %p111 = por %p109, %p110
      %p112 = scmp.ne.s32.totalorder %s98, %s99
      %p113 = scmp.eq.s32.totalorder %s39, 1
      %p114 = por %p112, %p113
      %p116 = scmp.ne.s32.totalorder %s99, %s115
      %p117 = scmp.eq.s32.totalorder %s39, 0
      %p118 = por %p116, %p117
      %s120 = sadd.s32 %s119, 1
      %p123 = scmp.eq.s32.totalorder %s33, 1
      %p124 = scmp.ne.s32.totalorder %s119, %s121
      %p125 = scmp.eq.s32.totalorder %s33, 0
      %p126 = por %p124, %p125
      %p127 = scmp.ne.s32.totalorder %s119, %s121
      %p128 = scmp.eq.s32.totalorder %s38, 1
      %p129 = por %p127, %p128
      %p130 = scmp.ne.s32.totalorder %s121, %s122
      %p131 = scmp.eq.s32.totalorder %s38, 0
      %p132 = por %p130, %p131
      %p133 = scmp.ne.s32.totalorder %s121, %s122
      %p134 = scmp.eq.s32.totalorder %s39, 1
      %p135 = por %p133, %p134
      %p137 = scmp.ne.s32.totalorder %s122, %s136
      %p138 = scmp.eq.s32.totalorder %s39, 0
      %p139 = por %p137, %p138
      %s141 = sadd.s32 %s140, 1
      %p144 = scmp.eq.s32.totalorder %s33, 1
      %p145 = scmp.ne.s32.totalorder %s140, %s142
      %p146 = scmp.eq.s32.totalorder %s33, 0
      %p147 = por %p145, %p146
      %p148 = scmp.ne.s32.totalorder %s140, %s142
      %p149 = scmp.eq.s32.totalorder %s38, 1
      %p150 = por %p148, %p149
      %p151 = scmp.ne.s32.totalorder %s142, %s143
      %p152 = scmp.eq.s32.totalorder %s38, 0
      %p153 = por %p151, %p152
      %p154 = scmp.ne.s32.totalorder %s142, %s143
      %p155 = scmp.eq.s32.totalorder %s39, 1
      %p156 = por %p154, %p155
      %p158 = scmp.ne.s32.totalorder %s143, %s157
      %p159 = scmp.eq.s32.totalorder %s39, 0
      %p160 = por %p158, %p159
      %s162 = sadd.s32 %s161, 1
      %p165 = scmp.eq.s32.totalorder %s33, 1
      %p166 = scmp.ne.s32.totalorder %s161, %s163
      %p167 = scmp.eq.s32.totalorder %s33, 0
      %p168 = por %p166, %p167
      %p169 = scmp.ne.s32.totalorder %s161, %s163
      %p170 = scmp.eq.s32.totalorder %s38, 1
      %p171 = por %p169, %p170
      %p172 = scmp.ne.s32.totalorder %s163, %s164
      %p173 = scmp.eq.s32.totalorder %s38, 0
      %p174 = por %p172, %p173
      %p175 = scmp.ne.s32.totalorder %s163, %s164
      %p176 = scmp.eq.s32.totalorder %s39, 1
      %p177 = por %p175, %p176
      %p179 = scmp.ne.s32.totalorder %s164, %s178
      %p180 = scmp.eq.s32.totalorder %s39, 0
      %p181 = por %p179, %p180
      %s183 = sadd.s32 %s182, 1
      %p186 = scmp.eq.s32.totalorder %s33, 1
      %p187 = scmp.ne.s32.totalorder %s182, %s184
      %p188 = scmp.eq.s32.totalorder %s33, 0
      %p189 = por %p187, %p188
      %p190 = scmp.ne.s32.totalorder %s182, %s184
      %p191 = scmp.eq.s32.totalorder %s38, 1
      %p192 = por %p190, %p191
      %p193 = scmp.ne.s32.totalorder %s184, %s185
      %p194 = scmp.eq.s32.totalorder %s38, 0
      %p195 = por %p193, %p194
      %p196 = scmp.ne.s32.totalorder %s184, %s185
      %p197 = scmp.eq.s32.totalorder %s39, 1
      %p198 = por %p196, %p197
      %p200 = scmp.ne.s32.totalorder %s185, %s199
      %p201 = scmp.eq.s32.totalorder %s39, 0
      %p202 = por %p200, %p201
      %s204 = sadd.s32 %s203, 1
      %p207 = scmp.eq.s32.totalorder %s33, 1
      %p208 = scmp.ne.s32.totalorder %s203, %s205
      %p209 = scmp.eq.s32.totalorder %s33, 0
      %p210 = por %p208, %p209
      %p211 = scmp.ne.s32.totalorder %s203, %s205
      %p212 = scmp.eq.s32.totalorder %s38, 1
      %p213 = por %p211, %p212
      %p214 = scmp.ne.s32.totalorder %s205, %s206
      %p215 = scmp.eq.s32.totalorder %s38, 0
      %p216 = por %p214, %p215
      %p217 = scmp.ne.s32.totalorder %s205, %s206
      %p218 = scmp.eq.s32.totalorder %s39, 1
      %p219 = por %p217, %p218
      %p221 = scmp.ne.s32.totalorder %s206, %s220
      %p222 = scmp.eq.s32.totalorder %s39, 0
      %p223 = por %p221, %p222
      %s225 = sadd.s32 %s224, 1
      %p228 = scmp.eq.s32.totalorder %s33, 1
      %p229 = scmp.ne.s32.totalorder %s224, %s226
      %p230 = scmp.eq.s32.totalorder %s33, 0
      %p231 = por %p229, %p230
      %p232 = scmp.ne.s32.totalorder %s224, %s226
      %p233 = scmp.eq.s32.totalorder %s38, 1
      %p234 = por %p232, %p233
      %p235 = scmp.ne.s32.totalorder %s226, %s227
      %p236 = scmp.eq.s32.totalorder %s38, 0
      %p237 = por %p235, %p236
      %p238 = scmp.ne.s32.totalorder %s226, %s227
      %p239 = scmp.eq.s32.totalorder %s39, 1
      %p240 = por %p238, %p239
      %p242 = scmp.ne.s32.totalorder %s227, %s241
      %p243 = scmp.eq.s32.totalorder %s39, 0
      %p244 = por %p242, %p243
      %s246 = sadd.s32 %s245, 1
      %p249 = scmp.eq.s32.totalorder %s33, 1
      %p250 = scmp.ne.s32.totalorder %s245, %s247
      %p251 = scmp.eq.s32.totalorder %s33, 0
      %p252 = por %p250, %p251
      %p253 = scmp.ne.s32.totalorder %s245, %s247
      %p254 = scmp.eq.s32.totalorder %s38, 1
      %p255 = por %p253, %p254
      %p256 = scmp.ne.s32.totalorder %s247, %s248
      %p257 = scmp.eq.s32.totalorder %s38, 0
      %p258 = por %p256, %p257
      %p259 = scmp.ne.s32.totalorder %s247, %s248
      %p260 = scmp.eq.s32.totalorder %s39, 1
      %p261 = por %p259, %p260
      %p263 = scmp.ne.s32.totalorder %s248, %s262
      %p264 = scmp.eq.s32.totalorder %s39, 0
      %p265 = por %p263, %p264
      %s267 = sadd.s32 %s266, 1
      %p270 = scmp.eq.s32.totalorder %s33, 1
      %p271 = scmp.ne.s32.totalorder %s266, %s268
      %p272 = scmp.eq.s32.totalorder %s33, 0
      %p273 = por %p271, %p272
      %p274 = scmp.ne.s32.totalorder %s266, %s268
      %p275 = scmp.eq.s32.totalorder %s38, 1
      %p276 = por %p274, %p275
      %p277 = scmp.ne.s32.totalorder %s268, %s269
      %p278 = scmp.eq.s32.totalorder %s38, 0
      %p279 = por %p277, %p278
      %p280 = scmp.ne.s32.totalorder %s268, %s269
      %p281 = scmp.eq.s32.totalorder %s39, 1
      %p282 = por %p280, %p281
      %p284 = scmp.ne.s32.totalorder %s269, %s283
      %p285 = scmp.eq.s32.totalorder %s39, 0
      %p286 = por %p284, %p285
      %s287 = ssub.s32 %s33, %s40
      %p288 = scmp.eq.s32.totalorder %s287, 0
      %s290 = sadd.s32 %s289, 1
      %s291 = scalar_select %p288, %s289, %s290
      %p294 = pneg %p288
      %p295 = scmp.eq.s32.totalorder %s33, 1
      %p296 = por %p294, %p295
      %p297 = scmp.ne.s32.totalorder %s289, %s292
      %p298 = scmp.eq.s32.totalorder %s33, 0
      %p299 = por %p297, %p298
      %p300 = scmp.ne.s32.totalorder %s289, %s292
      %p301 = scmp.eq.s32.totalorder %s38, 1
      %p302 = por %p300, %p301
      %p303 = scmp.ne.s32.totalorder %s292, %s293
      %p304 = scmp.eq.s32.totalorder %s38, 0
      %p305 = por %p303, %p304
      %p306 = scmp.ne.s32.totalorder %s292, %s293
      %p307 = scmp.eq.s32.totalorder %s39, 1
      %p308 = por %p306, %p307
      %p310 = scmp.ne.s32.totalorder %s293, %s309
      %p311 = scmp.eq.s32.totalorder %s39, 0
      %p312 = por %p310, %p311
      %s313 = ssub.s32 %s33, %s40
      %p314 = scmp.eq.s32.totalorder %s313, 0
      %s316 = sadd.s32 %s315, 1
      %s317 = scalar_select %p314, %s315, %s316
      %p320 = pneg %p314
      %p321 = scmp.eq.s32.totalorder %s33, 1
      %p322 = por %p320, %p321
      %p323 = scmp.ne.s32.totalorder %s315, %s318
      %p324 = scmp.eq.s32.totalorder %s33, 0
      %p325 = por %p323, %p324
      %p326 = scmp.ne.s32.totalorder %s315, %s318
      %p327 = scmp.eq.s32.totalorder %s38, 1
      %p328 = por %p326, %p327
      %p329 = scmp.ne.s32.totalorder %s318, %s319
      %p330 = scmp.eq.s32.totalorder %s38, 0
      %p331 = por %p329, %p330
      %p332 = scmp.ne.s32.totalorder %s318, %s319
      %p333 = scmp.eq.s32.totalorder %s39, 1
      %p334 = por %p332, %p333
      %p336 = scmp.ne.s32.totalorder %s319, %s335
      %p337 = scmp.eq.s32.totalorder %s39, 0
      %p338 = por %p336, %p337
      %p339 = scmp.le.s32.totalorder 1, %s33
      %p340 = scmp.lt.s32.totalorder %s33, 3
      %p341 = pnand %p339, %p340
      %p342 = pneg %p341
      // Predicated region
      $region9: #{tpu_custom_call.1} parent=5 // pred_check
        _
      $region10: #{tpu_custom_call.1} parent=5 // pred_check_branch
        %344 = sbr.rel (%p341) target = $region12
      $region11: #{tpu_custom_call.1} parent=5 // pred_region
        %s345 = ssub.s32 %s33, 1
        // Predicated region
        $region13: #{tpu_custom_call.1} parent=11 // pred_check
          %p346 = pneg %p132
        $region14: #{tpu_custom_call.1} parent=11 // pred_check_branch
          %348 = sbr.rel (%p346) target = $region16
        $region15: #{tpu_custom_call.1} parent=11 // pred_region
          %350 = vsyncadd [#allocation10], 0
          %s351 = sshll.u32 %s3, 4
          %s352 = int_to_ptr.hbm [resolvable:$true] %s351
          %s353 = sshll.u32 [#allocation9], 4
          %s354 = int_to_ptr.vmem [resolvable:$true] %s353
          %359 = dma.hbm_to_vmem [thread:$0]  %s352, 512, %s354, [#allocation10], 128, 128, 8
        $region16: #{tpu_custom_call.1} parent=11 // pred_fallthru
          _
        // Predicated region
        $region17: #{tpu_custom_call.1} parent=11 // pred_check
          %p360 = pneg %p153
        $region18: #{tpu_custom_call.1} parent=11 // pred_check_branch
          %362 = sbr.rel (%p360) target = $region20
        $region19: #{tpu_custom_call.1} parent=11 // pred_region
          _
        $region20: #{tpu_custom_call.1} parent=11 // pred_fallthru
          _
        // Predicated region
        $region21: #{tpu_custom_call.1} parent=11 // pred_check
          %p363 = pneg %p174
        $region22: #{tpu_custom_call.1} parent=11 // pred_check_branch
          %365 = sbr.rel (%p363) target = $region24
        $region23: #{tpu_custom_call.1} parent=11 // pred_region
          %367 = vsyncadd [#allocation10], 0
          %s368 = sshll.u32 %s5, 4
          %s369 = int_to_ptr.hbm [resolvable:$true] %s368
          %s370 = sshll.u32 [#allocation11], 4
          %s371 = int_to_ptr.vmem [resolvable:$true] %s370
          %376 = dma.hbm_to_vmem [thread:$0]  %s369, 512, %s371, [#allocation10], 128, 128, 8
        $region24: #{tpu_custom_call.1} parent=11 // pred_fallthru
          _
        // Predicated region
        $region25: #{tpu_custom_call.1} parent=11 // pred_check
          %p377 = pneg %p195
        $region26: #{tpu_custom_call.1} parent=11 // pred_check_branch
          %379 = sbr.rel (%p377) target = $region28
        $region27: #{tpu_custom_call.1} parent=11 // pred_region
          _
        $region28: #{tpu_custom_call.1} parent=11 // pred_fallthru
          _
        // Predicated region
        $region29: #{tpu_custom_call.1} parent=11 // pred_check
          %p380 = pneg %p216
        $region30: #{tpu_custom_call.1} parent=11 // pred_check_branch
          %382 = sbr.rel (%p380) target = $region32
        $region31: #{tpu_custom_call.1} parent=11 // pred_region
          %384 = vsyncadd [#allocation13], 0
          %s385 = sshll.u32 %s7, 4
          %s386 = int_to_ptr.hbm [resolvable:$true] %s385
          %s387 = sshll.u32 [#allocation12], 4
          %s388 = int_to_ptr.vmem [resolvable:$true] %s387
          %393 = dma.hbm_to_vmem [thread:$0]  %s386, 512, %s388, [#allocation13], 128, 128, 8
        $region32: #{tpu_custom_call.1} parent=11 // pred_fallthru
          _
        // Predicated region
        $region33: #{tpu_custom_call.1} parent=11 // pred_check
          %p394 = pneg %p237
        $region34: #{tpu_custom_call.1} parent=11 // pred_check_branch
          %396 = sbr.rel (%p394) target = $region36
        $region35: #{tpu_custom_call.1} parent=11 // pred_region
          _
        $region36: #{tpu_custom_call.1} parent=11 // pred_fallthru
          _
        // Predicated region
        $region37: #{tpu_custom_call.1} parent=11 // pred_check
          %p397 = pneg %p258
        $region38: #{tpu_custom_call.1} parent=11 // pred_check_branch
          %399 = sbr.rel (%p397) target = $region40
        $region39: #{tpu_custom_call.1} parent=11 // pred_region
          %401 = vsyncadd [#allocation13], 0
          %s402 = sshll.u32 %s9, 4
          %s403 = int_to_ptr.hbm [resolvable:$true] %s402
          %s404 = sshll.u32 [#allocation14], 4
          %s405 = int_to_ptr.vmem [resolvable:$true] %s404
          %410 = dma.hbm_to_vmem [thread:$0]  %s403, 512, %s405, [#allocation13], 128, 128, 8
        $region40: #{tpu_custom_call.1} parent=11 // pred_fallthru
          _
        // Predicated region
        $region41: #{tpu_custom_call.1} parent=11 // pred_check
          %p411 = pneg %p279
        $region42: #{tpu_custom_call.1} parent=11 // pred_check_branch
          %413 = sbr.rel (%p411) target = $region44
        $region43: #{tpu_custom_call.1} parent=11 // pred_region
          _
        $region44: #{tpu_custom_call.1} parent=11 // pred_fallthru
          _
      $region12: #{tpu_custom_call.1} parent=5 // pred_fallthru
        _
      %p414 = scmp.lt.s32.totalorder %s33, 2
      // Predicated region
      $region45: #{tpu_custom_call.1} parent=5 // pred_check
        %p415 = pneg %p414
      $region46: #{tpu_custom_call.1} parent=5 // pred_check_branch
        %417 = sbr.rel (%p415) target = $region48
      $region47: #{tpu_custom_call.1} parent=5 // pred_region
        // Predicated region
        $region49: #{tpu_custom_call.1} parent=47 // pred_check
          %p418 = pneg %p53
        $region50: #{tpu_custom_call.1} parent=47 // pred_check_branch
          %420 = sbr.rel (%p418) target = $region52
        $region51: #{tpu_custom_call.1} parent=47 // pred_region
          %s421 = sand.u32 %s43, 1
          %s422 = scalar_lea.sflag [#allocation4], %s421
          %s423 = sand.u32 %s43, 1
          %s424 = smul.addr %s423, 8
          %s425 = scalar_lea.vmem [#allocation3], %s424
          %427 = vsyncadd %s422, 0
          %s428 = smul.addr %s33, 8
          %s429 = scalar_lea.hbm %s0, %s428
          %s431 = sshll.u32 %s429, 4
          %s432 = int_to_ptr.hbm [resolvable:$true] %s431
          %s433 = sshll.u32 %s425, 4
          %s434 = int_to_ptr.vmem [resolvable:$true] %s433
          %436 = dma.hbm_to_vmem [thread:$0]  %s432, 128, %s434, %s422
        $region52: #{tpu_custom_call.1} parent=47 // pred_fallthru
          _
        // Predicated region
        $region53: #{tpu_custom_call.1} parent=47 // pred_check
          %p437 = pneg %p79
        $region54: #{tpu_custom_call.1} parent=47 // pred_check_branch
          %439 = sbr.rel (%p437) target = $region56
        $region55: #{tpu_custom_call.1} parent=47 // pred_region
          %s440 = sand.u32 %s33, 1
          %s441 = scalar_lea.sflag [#allocation7], %s440
          %s442 = sand.u32 %s69, 1
          %s443 = smul.addr %s442, 8
          %s444 = scalar_lea.vmem [#allocation6], %s443
          %446 = vsyncadd %s441, 0
          %s447 = smul.addr %s33, 8
          %s448 = scalar_lea.hbm %s1, %s447
          %s450 = sshll.u32 %s448, 4
          %s451 = int_to_ptr.hbm [resolvable:$true] %s450
          %s452 = sshll.u32 %s444, 4
          %s453 = int_to_ptr.vmem [resolvable:$true] %s452
          %455 = dma.hbm_to_vmem [thread:$0]  %s451, 128, %s453, %s441
        $region56: #{tpu_custom_call.1} parent=47 // pred_fallthru
          _
        // Predicated region
        $region57: #{tpu_custom_call.1} parent=47 // pred_check
          %p456 = pneg %p105
        $region58: #{tpu_custom_call.1} parent=47 // pred_check_branch
          %458 = sbr.rel (%p456) target = $region60
        $region59: #{tpu_custom_call.1} parent=47 // pred_region
          %s459 = sand.u32 %s33, 1
          %s460 = scalar_lea.sflag [#allocation7], %s459
          %s461 = sand.u32 %s95, 1
          %s462 = smul.addr %s461, 8
          %s463 = scalar_lea.vmem [#allocation8], %s462
          %465 = vsyncadd %s460, 0
          %s466 = smul.addr %s33, 8
          %s467 = scalar_lea.hbm %s2, %s466
          %s469 = sshll.u32 %s467, 4
          %s470 = int_to_ptr.hbm [resolvable:$true] %s469
          %s471 = sshll.u32 %s463, 4
          %s472 = int_to_ptr.vmem [resolvable:$true] %s471
          %474 = dma.hbm_to_vmem [thread:$0]  %s470, 128, %s472, %s460
        $region60: #{tpu_custom_call.1} parent=47 // pred_fallthru
          _
      $region48: #{tpu_custom_call.1} parent=5 // pred_fallthru
        _
      %p475 = scmp.le.s32.totalorder 1, %s33
      %p476 = scmp.lt.s32.totalorder %s33, 3
      %p477 = pnand %p475, %p476
      %p478 = pneg %p477
      // Predicated region
      $region61: #{tpu_custom_call.1} parent=5 // pred_check
        _
      $region62: #{tpu_custom_call.1} parent=5 // pred_check_branch
        %480 = sbr.rel (%p477) target = $region64
      $region63: #{tpu_custom_call.1} parent=5 // pred_region
        %s481 = ssub.s32 %s33, 1
        %s482 = sand.u32 %s46, 1
        %s483 = scalar_lea.sflag [#allocation4], %s482
        %s484 = sand.u32 %s46, 1
        %s485 = smul.addr %s484, 8
        %s486 = scalar_lea.vmem [#allocation3], %s485
        // Predicated region
        $region65: #{tpu_custom_call.1} parent=63 // pred_check
          %p487 = pneg %p59
        $region66: #{tpu_custom_call.1} parent=63 // pred_check_branch
          %489 = sbr.rel (%p487) target = $region68
        $region67: #{tpu_custom_call.1} parent=63 // pred_region
          %491 = dma.done %s483, 128
        $region68: #{tpu_custom_call.1} parent=63 // pred_fallthru
          _
        %s492 = sand.u32 %s38, 1
        %s493 = scalar_lea.sflag [#allocation7], %s492
        %s494 = sand.u32 %s72, 1
        %s495 = smul.addr %s494, 8
        %s496 = scalar_lea.vmem [#allocation6], %s495
        // Predicated region
        $region69: #{tpu_custom_call.1} parent=63 // pred_check
          %p497 = pneg %p85
        $region70: #{tpu_custom_call.1} parent=63 // pred_check_branch
          %499 = sbr.rel (%p497) target = $region72
        $region71: #{tpu_custom_call.1} parent=63 // pred_region
          %501 = dma.done %s493, 128
        $region72: #{tpu_custom_call.1} parent=63 // pred_fallthru
          _
        %s502 = sand.u32 %s38, 1
        %s503 = scalar_lea.sflag [#allocation7], %s502
        %s504 = sand.u32 %s98, 1
        %s505 = smul.addr %s504, 8
        %s506 = scalar_lea.vmem [#allocation8], %s505
        // Predicated region
        $region73: #{tpu_custom_call.1} parent=63 // pred_check
          %p507 = pneg %p111
        $region74: #{tpu_custom_call.1} parent=63 // pred_check_branch
          %509 = sbr.rel (%p507) target = $region76
        $region75: #{tpu_custom_call.1} parent=63 // pred_region
          %511 = dma.done %s503, 128
        $region76: #{tpu_custom_call.1} parent=63 // pred_fallthru
          _
        // Predicated region
        $region77: #{tpu_custom_call.1} parent=63 // pred_check
          %p512 = pneg %p132
        $region78: #{tpu_custom_call.1} parent=63 // pred_check_branch
          %514 = sbr.rel (%p512) target = $region80
        $region79: #{tpu_custom_call.1} parent=63 // pred_region
          %516 = dma.done [#allocation10], 512
        $region80: #{tpu_custom_call.1} parent=63 // pred_fallthru
          _
        // Predicated region
        $region81: #{tpu_custom_call.1} parent=63 // pred_check
          %p517 = pneg %p174
        $region82: #{tpu_custom_call.1} parent=63 // pred_check_branch
          %519 = sbr.rel (%p517) target = $region84
        $region83: #{tpu_custom_call.1} parent=63 // pred_region
          %521 = dma.done [#allocation10], 512
        $region84: #{tpu_custom_call.1} parent=63 // pred_fallthru
          _
        // Predicated region
        $region85: #{tpu_custom_call.1} parent=63 // pred_check
          %p522 = pneg %p216
        $region86: #{tpu_custom_call.1} parent=63 // pred_check_branch
          %524 = sbr.rel (%p522) target = $region88
        $region87: #{tpu_custom_call.1} parent=63 // pred_region
          %526 = dma.done [#allocation13], 512
        $region88: #{tpu_custom_call.1} parent=63 // pred_fallthru
          _
        // Predicated region
        $region89: #{tpu_custom_call.1} parent=63 // pred_check
          %p527 = pneg %p258
        $region90: #{tpu_custom_call.1} parent=63 // pred_check_branch
          %529 = sbr.rel (%p527) target = $region92
        $region91: #{tpu_custom_call.1} parent=63 // pred_region
          %531 = dma.done [#allocation13], 512
        $region92: #{tpu_custom_call.1} parent=63 // pred_fallthru
          _
        %s532 = sand.u32 %s46, 1
        %s533 = scalar_lea.sflag [#allocation4], %s532
        %s534 = sand.u32 %s46, 1
        %s535 = smul.addr %s534, 8
        %s536 = scalar_lea.vmem [#allocation3], %s535
        %p537 = pneg %p59
        %p538 = pneg %p56
        %s539 = sand.u32 %s38, 1
        %s540 = scalar_lea.sflag [#allocation7], %s539
        %s541 = sand.u32 %s72, 1
        %s542 = smul.addr %s541, 8
        %s543 = scalar_lea.vmem [#allocation6], %s542
        %p544 = pneg %p85
        %p545 = pneg %p82
        %s546 = sand.u32 %s38, 1
        %s547 = scalar_lea.sflag [#allocation7], %s546
        %s548 = sand.u32 %s98, 1
        %s549 = smul.addr %s548, 8
        %s550 = scalar_lea.vmem [#allocation8], %s549
        %p551 = pneg %p111
        %p552 = pneg %p108
        %p553 = pneg %p132
        %p554 = pneg %p129
        %p555 = pneg %p153
        %p556 = pneg %p150
        %p557 = pneg %p174
        %p558 = pneg %p171
        %p559 = pneg %p195
        %p560 = pneg %p192
        %p561 = pneg %p216
        %p562 = pneg %p213
        %p563 = pneg %p237
        %p564 = pneg %p234
        %p565 = pneg %p258
        %p566 = pneg %p255
        %p567 = pneg %p279
        %p568 = pneg %p276
        %p569 = pneg %p305
        %p570 = pneg %p302
        %s571 = sand.u32 %s292, 1
        %s572 = scalar_lea.sflag [#allocation5], %s571
        %s573 = sand.u32 %s292, 1
        %s574 = smul.addr %s573, 8
        %s575 = scalar_lea.vmem [#allocation15], %s574
        %p576 = pneg %p331
        %p577 = pneg %p328
        %s578 = sand.u32 %s318, 1
        %s579 = scalar_lea.sflag [#allocation17], %s578
        %s580 = sand.u32 %s318, 1
        %s581 = smul.addr %s580, 32
        %s582 = scalar_lea.vmem [#allocation16], %s581
        %v583 = vld [vmem:[%s486] sm:$0xff]
        %v584 = vld [vmem:[%s496] sm:$0xff]
        %v585 = vld [vmem:[%s506] sm:$0xff]
        %v586 = vld [vmem:[#allocation9] sm:$0xff]
        %v587 = vld [vmem:[#allocation9 + $0x8] sm:$0xff]
        %v588 = vld [vmem:[#allocation9 + $0x10] sm:$0xff]
        %v589 = vld [vmem:[#allocation9 + $0x18] sm:$0xff]
        %v590 = vld [vmem:[%s4] sm:$0x1]
        %v592 = vperm.slane %v590, 0
        %vm594 = vcmask 261120
        %v596 = vsel %vm594, %v583, 0
        %598 = vmatpush.msra.mxu0 0.0
        %599 = vmatpush.msra.mxu0 0.0
        %600 = vmatpush.msra.mxu0 0.0
        %601 = vmatpush.msra.mxu0 0.0
        %602 = vmatpush.msra.mxu0 0.0
        %603 = vmatpush.msra.mxu0 0.0
        %604 = vmatpush.msra.mxu0 0.0
        %605 = vmatpush.msra.mxu0 0.0
        %606 = vmatpush.msra.mxu0 0.0
        %607 = vmatpush.msra.mxu0 0.0
        %608 = vmatpush.msra.mxu0 0.0
        %609 = vmatpush.msra.mxu0 0.0
        %610 = vmatpush.msra.mxu0 %v589
        %611 = vmatpush.msra.mxu0 %v588
        %612 = vmatpush.msra.mxu0 %v587
        %613 = vmatpush.msra.mxu0 %v586
        %614 = vmatmul.f32.gmra.mxu0 %v596
        %v615 = vpop.f32.mrf.mxu0
        %v616 = vadd.f32 %v592, %v615
        %617 = vdwg.mxu0
        %v618 = vld [vmem:[#allocation11] sm:$0xff]
        %v619 = vld [vmem:[#allocation11 + $0x8] sm:$0xff]
        %v620 = vld [vmem:[#allocation11 + $0x10] sm:$0xff]
        %v621 = vld [vmem:[#allocation11 + $0x18] sm:$0xff]
        %v622 = vld [vmem:[%s6] sm:$0x1]
        %v624 = vperm.slane %v622, 0
        %v627 = vsel %vm594, %v584, 0
        %629 = vmatpush.msra.mxu0 0.0
        %630 = vmatpush.msra.mxu0 0.0
        %631 = vmatpush.msra.mxu0 0.0
        %632 = vmatpush.msra.mxu0 0.0
        %633 = vmatpush.msra.mxu0 0.0
        %634 = vmatpush.msra.mxu0 0.0
        %635 = vmatpush.msra.mxu0 0.0
        %636 = vmatpush.msra.mxu0 0.0
        %637 = vmatpush.msra.mxu0 0.0
        %638 = vmatpush.msra.mxu0 0.0
        %639 = vmatpush.msra.mxu0 0.0
        %640 = vmatpush.msra.mxu0 0.0
        %641 = vmatpush.msra.mxu0 %v621
        %642 = vmatpush.msra.mxu0 %v620
        %643 = vmatpush.msra.mxu0 %v619
        %644 = vmatpush.msra.mxu0 %v618
        %645 = vmatmul.f32.gmra.mxu0 %v627
        %v646 = vpop.f32.mrf.mxu0
        %v647 = vadd.f32 %v624, %v646
        %648 = vdwg.mxu0
        %v649 = vld [vmem:[#allocation12] sm:$0xff]
        %v650 = vld [vmem:[#allocation12 + $0x8] sm:$0xff]
        %v651 = vld [vmem:[#allocation12 + $0x10] sm:$0xff]
        %v652 = vld [vmem:[#allocation12 + $0x18] sm:$0xff]
        %v653 = vld [vmem:[%s8] sm:$0x1]
        %v655 = vperm.slane %v653, 0
        %v658 = vsel %vm594, %v585, 0
        %660 = vmatpush.msra.mxu0 0.0
        %661 = vmatpush.msra.mxu0 0.0
        %662 = vmatpush.msra.mxu0 0.0
        %663 = vmatpush.msra.mxu0 0.0
        %664 = vmatpush.msra.mxu0 0.0
        %665 = vmatpush.msra.mxu0 0.0
        %666 = vmatpush.msra.mxu0 0.0
        %667 = vmatpush.msra.mxu0 0.0
        %668 = vmatpush.msra.mxu0 0.0
        %669 = vmatpush.msra.mxu0 0.0
        %670 = vmatpush.msra.mxu0 0.0
        %671 = vmatpush.msra.mxu0 0.0
        %672 = vmatpush.msra.mxu0 %v652
        %673 = vmatpush.msra.mxu0 %v651
        %674 = vmatpush.msra.mxu0 %v650
        %675 = vmatpush.msra.mxu0 %v649
        %676 = vmatmul.f32.gmra.mxu0 %v658
        %v677 = vpop.f32.mrf.mxu0
        %v678 = vadd.f32 %v655, %v677
        %679 = vdwg.mxu0
        %vm680 = vcmask 64512
        %v682 = vsel %vm680, %v616, 0
        %v685 = vsel %vm680, %v647, 0
        %687 = vmatpush.xpose.msra.mxu0 0.0
        %688 = vmatpush.xpose.msra.mxu0 0.0
        %689 = vmatpush.xpose.msra.mxu0 0.0
        %690 = vmatpush.xpose.msra.mxu0 0.0
        %691 = vmatpush.xpose.msra.mxu0 0.0
        %692 = vmatpush.xpose.msra.mxu0 0.0
        %693 = vmatpush.xpose.msra.mxu0 0.0
        %694 = vmatpush.xpose.msra.mxu0 0.0
        %695 = vmatpush.xpose.msra.mxu0 0.0
        %696 = vmatpush.xpose.msra.mxu0 0.0
        %697 = vmatpush.xpose.msra.mxu0 0.0
        %698 = vmatpush.xpose.msra.mxu0 0.0
        %699 = vmatpush.xpose.msra.mxu0 0.0
        %700 = vmatpush.xpose.msra.mxu0 0.0
        %701 = vmatpush.xpose.msra.mxu0 0.0
        %702 = vmatpush.xpose.msra.mxu0 %v685
        %703 = vmatmul.f32.gmra.mxu0 %v682
        %v704 = vpop.f32.mrf.mxu0
        %v705 = vadd.f32 0.0, %v704
        %706 = vdwg.mxu0
        %v707 = vsel %vm680, %v705, -inf
        %708 = vmax.xlane.f32.xlu0 %v707
        %v709 = vpop.xlane.xlu0 %708
        %v710 = vsub.f32 %v705, %v709
        %v711 = vmul.f32 %v710, 1.442695
        %v712 = vpow.pop %v711
        %v713 = vsel %vm680, %v712, 0.0
        %714 = vadd.xlane.f32.xlu0 %v713
        %v715 = vpop.xlane.xlu0 %714
        %v716 = vrcp.pop %v715
        %v717 = vmul.f32 %v715, %v716
        %v718 = vsub.f32 1.0, %v717
        %v719 = vmul.f32 %v716, %v718
        %v720 = vadd.f32 %v716, %v719
        %vm721 = vweird.f32 %v715
        %vm722 = vweird.f32 %v716
        %vm723 = vmor %vm721, %vm722
        %v724 = vsel %vm723, %v716, %v720
        %v725 = vand.u32 2147483647, %v715
        %vm726 = vcmp.eq.f32.partialorder %v725, 8.507059e+37
        %v727 = vand.u32 %v715, 2147483648
        %v728 = vor.u32 1.1754944e-38, %v727
        %v729 = vsel %vm726, %v728, %v724
        %v730 = vmul.f32 %v712, %v729
        %731 = vst.msk [vmem:[%s582] sm:$0xff] %vm680, %v730
        %v733 = vsel %vm680, %v730, 0
        %735 = vmatpush.msra.mxu0 0.0
        %736 = vmatpush.msra.mxu0 0.0
        %737 = vmatpush.msra.mxu0 0.0
        %738 = vmatpush.msra.mxu0 0.0
        %739 = vmatpush.msra.mxu0 0.0
        %740 = vmatpush.msra.mxu0 0.0
        %741 = vmatpush.msra.mxu0 0.0
        %742 = vmatpush.msra.mxu0 0.0
        %743 = vmatpush.msra.mxu0 0.0
        %744 = vmatpush.msra.mxu0 0.0
        %745 = vmatpush.msra.mxu0 0.0
        %746 = vmatpush.msra.mxu0 0.0
        %747 = vmatpush.msra.mxu0 0.0
        %748 = vmatpush.msra.mxu0 0.0
        %749 = vmatpush.msra.mxu0 0.0
        %750 = vmatpush.msra.mxu0 %v678
        %751 = vmatmul.f32.gmra.mxu0 %v733
        %v752 = vpop.f32.mrf.mxu0
        %v753 = vadd.f32 0.0, %v752
        %754 = vdwg.mxu0
        %755 = vst.msk [vmem:[#allocation2] sm:$0xff] %vm680, %v753
        %756 = vrot.lane.b32.xlu0 %v616, 120
        %v757 = vpop.permute.xlu0 %756
        %758 = vrot.lane.b32.xlu0 %v647, 120
        %v759 = vpop.permute.xlu0 %758
        %v760 = vsel %vm680, %v757, 0
        %v762 = vsel %vm680, %v759, 0
        %764 = vmatpush.xpose.msra.mxu0 0.0
        %765 = vmatpush.xpose.msra.mxu0 0.0
        %766 = vmatpush.xpose.msra.mxu0 0.0
        %767 = vmatpush.xpose.msra.mxu0 0.0
        %768 = vmatpush.xpose.msra.mxu0 0.0
        %769 = vmatpush.xpose.msra.mxu0 0.0
        %770 = vmatpush.xpose.msra.mxu0 0.0
        %771 = vmatpush.xpose.msra.mxu0 0.0
        %772 = vmatpush.xpose.msra.mxu0 0.0
        %773 = vmatpush.xpose.msra.mxu0 0.0
        %774 = vmatpush.xpose.msra.mxu0 0.0
        %775 = vmatpush.xpose.msra.mxu0 0.0
        %776 = vmatpush.xpose.msra.mxu0 0.0
        %777 = vmatpush.xpose.msra.mxu0 0.0
        %778 = vmatpush.xpose.msra.mxu0 0.0
        %779 = vmatpush.xpose.msra.mxu0 %v762
        %780 = vmatmul.f32.gmra.mxu0 %v760
        %v781 = vpop.f32.mrf.mxu0
        %v782 = vadd.f32 0.0, %v781
        %783 = vdwg.mxu0
        %v784 = vsel %vm680, %v782, -inf
        %785 = vmax.xlane.f32.xlu0 %v784
        %v786 = vpop.xlane.xlu0 %785
        %v787 = vsub.f32 %v782, %v786
        %v788 = vmul.f32 %v787, 1.442695
        %v789 = vpow.pop %v788
        %v790 = vsel %vm680, %v789, 0.0
        %791 = vadd.xlane.f32.xlu0 %v790
        %v792 = vpop.xlane.xlu0 %791
        %v793 = vrcp.pop %v792
        %v794 = vmul.f32 %v792, %v793
        %v795 = vsub.f32 1.0, %v794
        %v796 = vmul.f32 %v793, %v795
        %v797 = vadd.f32 %v793, %v796
        %vm798 = vweird.f32 %v792
        %vm799 = vweird.f32 %v793
        %vm800 = vmor %vm798, %vm799
        %v801 = vsel %vm800, %v793, %v797
        %v802 = vand.u32 2147483647, %v792
        %vm803 = vcmp.eq.f32.partialorder %v802, 8.507059e+37
        %v804 = vand.u32 %v792, 2147483648
        %v805 = vor.u32 1.1754944e-38, %v804
        %v806 = vsel %vm803, %v805, %v801
        %v807 = vmul.f32 %v789, %v806
        %s808 = scalar_lea.vmem %s582, 8 [#allocation16]
        %809 = vst.msk [vmem:[%s808] sm:$0xff] %vm680, %v807
        %811 = vrot.lane.b32.xlu0 %v678, 120
        %v812 = vpop.permute.xlu0 %811
        %v815 = vsel %vm680, %v807, 0
        %817 = vmatpush.msra.mxu0 0.0
        %818 = vmatpush.msra.mxu0 0.0
        %819 = vmatpush.msra.mxu0 0.0
        %820 = vmatpush.msra.mxu0 0.0
        %821 = vmatpush.msra.mxu0 0.0
        %822 = vmatpush.msra.mxu0 0.0
        %823 = vmatpush.msra.mxu0 0.0
        %824 = vmatpush.msra.mxu0 0.0
        %825 = vmatpush.msra.mxu0 0.0
        %826 = vmatpush.msra.mxu0 0.0
        %827 = vmatpush.msra.mxu0 0.0
        %828 = vmatpush.msra.mxu0 0.0
        %829 = vmatpush.msra.mxu0 0.0
        %830 = vmatpush.msra.mxu0 0.0
        %831 = vmatpush.msra.mxu0 0.0
        %832 = vmatpush.msra.mxu0 %v812
        %833 = vmatmul.f32.gmra.mxu0 %v815
        %v834 = vpop.f32.mrf.mxu0
        %v835 = vadd.f32 0.0, %v834
        %836 = vdwg.mxu0
        %838 = vrot.lane.b32.xlu0 %v835, 8
        %v839 = vpop.permute.xlu0 %838
        %vm841 = vcmask 130112
        %842 = vst.msk [vmem:[#allocation2] sm:$0xff] %vm841, %v839
        %843 = vrot.lane.b32.xlu0 %v616, 112
        %v844 = vpop.permute.xlu0 %843
        %845 = vrot.lane.b32.xlu0 %v647, 112
        %v846 = vpop.permute.xlu0 %845
        %v847 = vsel %vm680, %v844, 0
        %v849 = vsel %vm680, %v846, 0
        %851 = vmatpush.xpose.msra.mxu0 0.0
        %852 = vmatpush.xpose.msra.mxu0 0.0
        %853 = vmatpush.xpose.msra.mxu0 0.0
        %854 = vmatpush.xpose.msra.mxu0 0.0
        %855 = vmatpush.xpose.msra.mxu0 0.0
        %856 = vmatpush.xpose.msra.mxu0 0.0
        %857 = vmatpush.xpose.msra.mxu0 0.0
        %858 = vmatpush.xpose.msra.mxu0 0.0
        %859 = vmatpush.xpose.msra.mxu0 0.0
        %860 = vmatpush.xpose.msra.mxu0 0.0
        %861 = vmatpush.xpose.msra.mxu0 0.0
        %862 = vmatpush.xpose.msra.mxu0 0.0
        %863 = vmatpush.xpose.msra.mxu0 0.0
        %864 = vmatpush.xpose.msra.mxu0 0.0
        %865 = vmatpush.xpose.msra.mxu0 0.0
        %866 = vmatpush.xpose.msra.mxu0 %v849
        %867 = vmatmul.f32.gmra.mxu0 %v847
        %v868 = vpop.f32.mrf.mxu0
        %v869 = vadd.f32 0.0, %v868
        %870 = vdwg.mxu0
        %v871 = vsel %vm680, %v869, -inf
        %872 = vmax.xlane.f32.xlu0 %v871
        %v873 = vpop.xlane.xlu0 %872
        %v874 = vsub.f32 %v869, %v873
        %v875 = vmul.f32 %v874, 1.442695
        %v876 = vpow.pop %v875
        %v877 = vsel %vm680, %v876, 0.0
        %878 = vadd.xlane.f32.xlu0 %v877
        %v879 = vpop.xlane.xlu0 %878
        %v880 = vrcp.pop %v879
        %v881 = vmul.f32 %v879, %v880
        %v882 = vsub.f32 1.0, %v881
        %v883 = vmul.f32 %v880, %v882
        %v884 = vadd.f32 %v880, %v883
        %vm885 = vweird.f32 %v879
        %vm886 = vweird.f32 %v880
        %vm887 = vmor %vm885, %vm886
        %v888 = vsel %vm887, %v880, %v884
        %v889 = vand.u32 2147483647, %v879
        %vm890 = vcmp.eq.f32.partialorder %v889, 8.507059e+37
        %v891 = vand.u32 %v879, 2147483648
        %v892 = vor.u32 1.1754944e-38, %v891
        %v893 = vsel %vm890, %v892, %v888
        %v894 = vmul.f32 %v876, %v893
        %s895 = scalar_lea.vmem %s582, 16 [#allocation16]
        %896 = vst.msk [vmem:[%s895] sm:$0xff] %vm680, %v894
        %897 = vrot.lane.b32.xlu0 %v678, 112
        %v898 = vpop.permute.xlu0 %897
        %v901 = vsel %vm680, %v894, 0
        %903 = vmatpush.msra.mxu0 0.0
        %904 = vmatpush.msra.mxu0 0.0
        %905 = vmatpush.msra.mxu0 0.0
        %906 = vmatpush.msra.mxu0 0.0
        %907 = vmatpush.msra.mxu0 0.0
        %908 = vmatpush.msra.mxu0 0.0
        %909 = vmatpush.msra.mxu0 0.0
        %910 = vmatpush.msra.mxu0 0.0
        %911 = vmatpush.msra.mxu0 0.0
        %912 = vmatpush.msra.mxu0 0.0
        %913 = vmatpush.msra.mxu0 0.0
        %914 = vmatpush.msra.mxu0 0.0
        %915 = vmatpush.msra.mxu0 0.0
        %916 = vmatpush.msra.mxu0 0.0
        %917 = vmatpush.msra.mxu0 0.0
        %918 = vmatpush.msra.mxu0 %v898
        %919 = vmatmul.f32.gmra.mxu0 %v901
        %v920 = vpop.f32.mrf.mxu0
        %v921 = vadd.f32 0.0, %v920
        %922 = vdwg.mxu0
        %924 = vrot.lane.b32.xlu0 %v921, 16
        %v925 = vpop.permute.xlu0 %924
        %vm927 = vcmask 195712
        %928 = vst.msk [vmem:[#allocation2] sm:$0xff] %vm927, %v925
        %929 = vrot.lane.b32.xlu0 %v616, 104
        %v930 = vpop.permute.xlu0 %929
        %931 = vrot.lane.b32.xlu0 %v647, 104
        %v932 = vpop.permute.xlu0 %931
        %v933 = vsel %vm680, %v930, 0
        %v935 = vsel %vm680, %v932, 0
        %937 = vmatpush.xpose.msra.mxu0 0.0
        %938 = vmatpush.xpose.msra.mxu0 0.0
        %939 = vmatpush.xpose.msra.mxu0 0.0
        %940 = vmatpush.xpose.msra.mxu0 0.0
        %941 = vmatpush.xpose.msra.mxu0 0.0
        %942 = vmatpush.xpose.msra.mxu0 0.0
        %943 = vmatpush.xpose.msra.mxu0 0.0
        %944 = vmatpush.xpose.msra.mxu0 0.0
        %945 = vmatpush.xpose.msra.mxu0 0.0
        %946 = vmatpush.xpose.msra.mxu0 0.0
        %947 = vmatpush.xpose.msra.mxu0 0.0
        %948 = vmatpush.xpose.msra.mxu0 0.0
        %949 = vmatpush.xpose.msra.mxu0 0.0
        %950 = vmatpush.xpose.msra.mxu0 0.0
        %951 = vmatpush.xpose.msra.mxu0 0.0
        %952 = vmatpush.xpose.msra.mxu0 %v935
        %953 = vmatmul.f32.gmra.mxu0 %v933
        %v954 = vpop.f32.mrf.mxu0
        %v955 = vadd.f32 0.0, %v954
        %956 = vdwg.mxu0
        %v957 = vsel %vm680, %v955, -inf
        %958 = vmax.xlane.f32.xlu0 %v957
        %v959 = vpop.xlane.xlu0 %958
        %v960 = vsub.f32 %v955, %v959
        %v961 = vmul.f32 %v960, 1.442695
        %v962 = vpow.pop %v961
        %v963 = vsel %vm680, %v962, 0.0
        %964 = vadd.xlane.f32.xlu0 %v963
        %v965 = vpop.xlane.xlu0 %964
        %v966 = vrcp.pop %v965
        %v967 = vmul.f32 %v965, %v966
        %v968 = vsub.f32 1.0, %v967
        %v969 = vmul.f32 %v966, %v968
        %v970 = vadd.f32 %v966, %v969
        %vm971 = vweird.f32 %v965
        %vm972 = vweird.f32 %v966
        %vm973 = vmor %vm971, %vm972
        %v974 = vsel %vm973, %v966, %v970
        %v975 = vand.u32 2147483647, %v965
        %vm976 = vcmp.eq.f32.partialorder %v975, 8.507059e+37
        %v977 = vand.u32 %v965, 2147483648
        %v978 = vor.u32 1.1754944e-38, %v977
        %v979 = vsel %vm976, %v978, %v974
        %v980 = vmul.f32 %v962, %v979
        %s981 = scalar_lea.vmem %s582, 24 [#allocation16]
        %982 = vst.msk [vmem:[%s981] sm:$0xff] %vm680, %v980
        %983 = vrot.lane.b32.xlu0 %v678, 104
        %v984 = vpop.permute.xlu0 %983
        %v987 = vsel %vm680, %v980, 0
        %989 = vmatpush.msra.mxu0 0.0
        %990 = vmatpush.msra.mxu0 0.0
        %991 = vmatpush.msra.mxu0 0.0
        %992 = vmatpush.msra.mxu0 0.0
        %993 = vmatpush.msra.mxu0 0.0
        %994 = vmatpush.msra.mxu0 0.0
        %995 = vmatpush.msra.mxu0 0.0
        %996 = vmatpush.msra.mxu0 0.0
        %997 = vmatpush.msra.mxu0 0.0
        %998 = vmatpush.msra.mxu0 0.0
        %999 = vmatpush.msra.mxu0 0.0
        %1000 = vmatpush.msra.mxu0 0.0
        %1001 = vmatpush.msra.mxu0 0.0
        %1002 = vmatpush.msra.mxu0 0.0
        %1003 = vmatpush.msra.mxu0 0.0
        %1004 = vmatpush.msra.mxu0 %v984
        %1005 = vmatmul.f32.gmra.mxu0 %v987
        %v1006 = vpop.f32.mrf.mxu0
        %v1007 = vadd.f32 0.0, %v1006
        %1008 = vdwg.mxu0
        %1010 = vrot.lane.b32.xlu0 %v1007, 24
        %v1011 = vpop.permute.xlu0 %1010
        %vm1013 = vcmask 261312
        %1014 = vst.msk [vmem:[#allocation2] sm:$0xff] %vm1013, %v1011
        %v1015 = vld [vmem:[#allocation2] sm:$0xff]
        %v1016 = vld [vmem:[#allocation14] sm:$0xff]
        %v1017 = vld [vmem:[#allocation14 + $0x8] sm:$0xff]
        %v1018 = vld [vmem:[#allocation14 + $0x10] sm:$0xff]
        %v1019 = vld [vmem:[#allocation14 + $0x18] sm:$0xff]
        %v1020 = vld [vmem:[%s10] sm:$0x1]
        %v1022 = vperm.slane %v1020, 0
        %v1025 = vsel %vm594, %v1015, 0
        %1027 = vmatpush.msra.mxu0 0.0
        %1028 = vmatpush.msra.mxu0 0.0
        %1029 = vmatpush.msra.mxu0 0.0
        %1030 = vmatpush.msra.mxu0 0.0
        %1031 = vmatpush.msra.mxu0 0.0
        %1032 = vmatpush.msra.mxu0 0.0
        %1033 = vmatpush.msra.mxu0 0.0
        %1034 = vmatpush.msra.mxu0 0.0
        %1035 = vmatpush.msra.mxu0 0.0
        %1036 = vmatpush.msra.mxu0 0.0
        %1037 = vmatpush.msra.mxu0 0.0
        %1038 = vmatpush.msra.mxu0 0.0
        %1039 = vmatpush.msra.mxu0 %v1019
        %1040 = vmatpush.msra.mxu0 %v1018
        %1041 = vmatpush.msra.mxu0 %v1017
        %1042 = vmatpush.msra.mxu0 %v1016
        %1043 = vmatmul.f32.gmra.mxu0 %v1025
        %v1044 = vpop.f32.mrf.mxu0
        %v1045 = vadd.f32 %v1022, %v1044
        %1046 = vdwg.mxu0
        %1047 = vst.msk [vmem:[%s575] sm:$0xff] %vm594, %v1045
        %s1048 = sand.u32 %s292, 1
        %s1049 = scalar_lea.sflag [#allocation5], %s1048
        %s1050 = sand.u32 %s292, 1
        %s1051 = smul.addr %s1050, 8
        %s1052 = scalar_lea.vmem [#allocation15], %s1051
        %s1053 = sand.u32 %s318, 1
        %s1054 = scalar_lea.sflag [#allocation17], %s1053
        %s1055 = sand.u32 %s318, 1
        %s1056 = smul.addr %s1055, 32
        %s1057 = scalar_lea.vmem [#allocation16], %s1056
        // Predicated region
        $region93: #{tpu_custom_call.1} parent=63 // pred_check
          %p1058 = pneg %p302
        $region94: #{tpu_custom_call.1} parent=63 // pred_check_branch
          %1060 = sbr.rel (%p1058) target = $region96
        $region95: #{tpu_custom_call.1} parent=63 // pred_region
          %1062 = vsyncadd %s1049, 0
          %s1063 = smul.addr %s38, 8
          %s1064 = scalar_lea.hbm %s11, %s1063
          %s1066 = sshll.u32 %s1052, 4
          %s1067 = int_to_ptr.vmem [resolvable:$true] %s1066
          %s1068 = sshll.u32 %s1064, 4
          %s1069 = int_to_ptr.hbm [resolvable:$true] %s1068
          %1071 = dma.vmem_to_hbm [thread:$0]  %s1067, 128, %s1069, %s1049
        $region96: #{tpu_custom_call.1} parent=63 // pred_fallthru
          _
        // Predicated region
        $region97: #{tpu_custom_call.1} parent=63 // pred_check
          %p1072 = pneg %p328
        $region98: #{tpu_custom_call.1} parent=63 // pred_check_branch
          %1074 = sbr.rel (%p1072) target = $region100
        $region99: #{tpu_custom_call.1} parent=63 // pred_region
          %1076 = vsyncadd %s1054, 0
          %s1077 = smul.addr %s38, 4
          %s1078 = smul.addr %s1077, 8
          %s1079 = scalar_lea.hbm %s12, %s1078
          %s1080 = sshll.u32 %s1057, 4
          %s1081 = int_to_ptr.vmem [resolvable:$true] %s1080
          %s1082 = sshll.u32 %s1079, 4
          %s1083 = int_to_ptr.hbm [resolvable:$true] %s1082
          %1088 = dma.vmem_to_hbm [thread:$0]  %s1081, 512, %s1083, %s1054, 128, 128, 8
        $region100: #{tpu_custom_call.1} parent=63 // pred_fallthru
          _
      $region64: #{tpu_custom_call.1} parent=5 // pred_fallthru
        _
      %p1089 = scmp.le.s32.totalorder 2, %s33
      // Predicated region
      $region101: #{tpu_custom_call.1} parent=5 // pred_check
        %p1090 = pneg %p1089
      $region102: #{tpu_custom_call.1} parent=5 // pred_check_branch
        %1092 = sbr.rel (%p1090) target = $region104
      $region103: #{tpu_custom_call.1} parent=5 // pred_region
        %s1093 = ssub.s32 %s33, 2
        // Predicated region
        $region105: #{tpu_custom_call.1} parent=103 // pred_check
          %p1094 = pneg %p308
        $region106: #{tpu_custom_call.1} parent=103 // pred_check_branch
          %1096 = sbr.rel (%p1094) target = $region108
        $region107: #{tpu_custom_call.1} parent=103 // pred_region
          %s1097 = sand.u32 %s293, 1
          %s1098 = scalar_lea.sflag [#allocation5], %s1097
          %s1099 = sand.u32 %s293, 1
          %s1100 = smul.addr %s1099, 8
          %s1101 = scalar_lea.vmem [#allocation15], %s1100
          %1103 = dma.done %s1098, 128
        $region108: #{tpu_custom_call.1} parent=103 // pred_fallthru
          _
        // Predicated region
        $region109: #{tpu_custom_call.1} parent=103 // pred_check
          %p1104 = pneg %p334
        $region110: #{tpu_custom_call.1} parent=103 // pred_check_branch
          %1106 = sbr.rel (%p1104) target = $region112
        $region111: #{tpu_custom_call.1} parent=103 // pred_region
          %s1107 = sand.u32 %s319, 1
          %s1108 = scalar_lea.sflag [#allocation17], %s1107
          %s1109 = sand.u32 %s319, 1
          %s1110 = smul.addr %s1109, 32
          %s1111 = scalar_lea.vmem [#allocation16], %s1110
          %1113 = dma.done %s1108, 512
        $region112: #{tpu_custom_call.1} parent=103 // pred_fallthru
          _
      $region104: #{tpu_custom_call.1} parent=5 // pred_fallthru
        _
    $region6: #{tpu_custom_call.1} parent=1 // loop_footer
      %s37 = sadd.s32 1, %s33
    $region7: #{tpu_custom_call.1} parent=1 // loop_footer_branch
      %32 = sbr.rel target = $region3
    $region8: #{tpu_custom_call.1} parent=1 // loop_exit
      _
    %1114 = vsyncpa [#allocation4], 1
    %s1115 = scalar_lea.sflag [#allocation4], 1
    %1116 = vsyncpa %s1115, 1
    %1117 = vsyncpa [#allocation7], 1
    %s1118 = scalar_lea.sflag [#allocation7], 1
    %1119 = vsyncpa %s1118, 1
    %1120 = vsyncpa [#allocation10], 1
    %1121 = vsyncpa [#allocation13], 1
    %1122 = vsyncpa [#allocation5], 1
    %s1123 = scalar_lea.sflag [#allocation5], 1
    %1124 = vsyncpa %s1123, 1
    %1125 = vsyncpa [#allocation17], 1
    %s1126 = scalar_lea.sflag [#allocation17], 1
    %1127 = vsyncpa %s1126, 1

</llo_original>
